<compile_context>
chip_gen: v7x
topology: tpu7x:2x2x1
jax: 0.10.0
libtpu: 0.0.40
codegen_flags: <defaults>
</compile_context>

<pallas_src>
import jax
import jax.numpy as jnp
from jax.experimental import pallas as pl
from jax.experimental.pallas import tpu as pltpu

LEAKY_SLOPE = 0.01  # torch.nn.LeakyReLU default negative_slope


def _nf_kernel(x_ref, w_ref, sc_ref, out_ref, s_ref):
  """One batch tile (lanes = batch rows): runs all coupling layers.

  x_ref   : (2, bn)           row 0 / row 1 = the two coupling features
  w_ref   : (L, 2H, 3)        [:, :H, :] = s-net, [:, H:, :] = t-net;
                              lane 0 = Linear(1,H).w, 1 = Linear(1,H).b,
                              2 = Linear(H,1).w
  sc_ref  : (L, 3)  (SMEM)    [b2_s, b2_t, s_scale] per layer
  out_ref : (2, bn)
  s_ref   : (L, bn)           sigma_i in ORIGINAL row order
  """
  n_layers, two_h, _ = w_ref.shape
  hidden = two_h // 2

  def rowsum(hw):  # (H, bn) -> (1, bn): VPU add tree + one 8-sublane reduce
    rows = hw.shape[0]
    if rows > 8 and rows % 8 == 0:
      acc = hw[0:8]
      for r in range(8, rows, 8):
        acc = acc + hw[r:r + 8]
      return jnp.sum(acc, axis=0, keepdims=True)
    return jnp.sum(hw, axis=0, keepdims=True)

  u = x_ref[0:1, :]  # (1, bn) conditioning column
  v = x_ref[1:2, :]  # (1, bn) transformed column
  u_fin, v_fin = u, v

  for i in range(n_layers):  # static unroll, n_layers is small
    w1 = w_ref[i, :, 0:1]    # (2H, 1)
    b1 = w_ref[i, :, 1:2]    # (2H, 1)
    w2 = w_ref[i, :, 2:3]    # (2H, 1)

    # Fused s/t first layer: Linear(1,H) for both nets in one (2H, bn) slab.
    h = u * w1 + b1                              # (2H, 1)*(1, bn) -> (2H, bn)
    h = jnp.where(h >= 0, h, LEAKY_SLOPE * h)    # LeakyReLU(0.01), applied once
    hw = h * w2                                  # (2H, bn)

    sig = jnp.tanh(rowsum(hw[0:hidden, :]) + sc_ref[i, 0]) * sc_ref[i, 2]
    t = jnp.tanh(rowsum(hw[hidden:two_h, :]) + sc_ref[i, 1])

    v_new = v * jnp.exp(sig) + t
    s_ref[i:i + 1, :] = sig                      # full-lane-width store

    if i < n_layers - 1:
      u, v = v_new, u                            # column swap (row flip outside)
    else:
      u_fin, v_fin = u, v_new                    # torch returns pre-flip last layer

  out_ref[...] = jnp.concatenate([u_fin, v_fin], axis=0)  # single (2, bn) store


def normalizing_flow_forward(x, params, *, block_n=2048):
  """Equivalent of NormalizingFlow.forward(x) (the `x is not None` branch)."""
  (ws1, bs1, ws2, bs2, wt1, bt1, wt2, bt2, scale) = params
  n, d = x.shape
  assert d == 2
  n_layers, _, hidden = ws1.shape

  # Large lane-dense tiles; clamp for small toy inputs.
  bn = min(block_n, n)
  assert n % bn == 0 and (bn % 128 == 0 or bn == n)

  # Pack the 9 tiny parameter arrays into one VMEM table + one SMEM scalar table.
  col = lambda a: jnp.swapaxes(a, 1, 2)                  # (L,1,H) -> (L,H,1)
  w1 = jnp.concatenate([col(ws1), col(wt1)], axis=1)     # (L, 2H, 1)
  b1 = jnp.concatenate([col(bs1), col(bt1)], axis=1)     # (L, 2H, 1)
  w2 = jnp.concatenate([col(ws2), col(wt2)], axis=1)     # (L, 2H, 1)
  wpack = jnp.concatenate([w1, b1, w2], axis=2)          # (L, 2H, 3)
  spack = jnp.concatenate([bs2.reshape(n_layers, 1),
                           bt2.reshape(n_layers, 1),
                           scale.reshape(n_layers, 1)], axis=1)  # (L, 3)

  xT = x.T  # (2, N): batch rows map to lanes inside the kernel

  outT, s_all = pl.pallas_call(
      _nf_kernel,
      out_shape=(jax.ShapeDtypeStruct((2, n), jnp.float32),
                 jax.ShapeDtypeStruct((n_layers, n), jnp.float32)),
      grid=(n // bn,),
      in_specs=[
          pl.BlockSpec((2, bn), lambda g: (0, g)),
          pl.BlockSpec(wpack.shape, lambda g: (0, 0, 0)),
          pl.BlockSpec(memory_space=pltpu.MemorySpace.SMEM),
      ],
      out_specs=(
          pl.BlockSpec((2, bn), lambda g: (0, g)),
          pl.BlockSpec((n_layers, bn), lambda g: (0, g)),
      ),
      compiler_params=pltpu.CompilerParams(dimension_semantics=("parallel",)),
  )(xT, wpack, spack)

  # Glue: pure index permutations (torch's flip(dims=[0]) bookkeeping).
  # After layer i the rows have been reversed (i+1) times; layer i's s lives in
  # row order P^i, the returned output in P^(L-1).  One fused elementwise pass.
  out = outT.T                                           # (N, 2), original order
  if (n_layers - 1) % 2 == 1:
    out = out[::-1]
  odd = (jnp.arange(n_layers) % 2 == 1)[:, None]
  s_fixed = jnp.where(odd, s_all[:, ::-1], s_all)        # flip odd layers
  s_cat = s_fixed.reshape(n_layers * n, 1)               # == torch.cat(s_vals)
  return out, s_cat


def reference_forward(x, params):
  """Literal (pure-JAX) transcription of the torch forward, for verification."""
  (ws1, bs1, ws2, bs2, wt1, bt1, wt2, bt2, scale) = params
  n_layers = ws1.shape[0]

  def mlp(y, w1, b1, w2, b2):
    h = y * w1 + b1
    h = jnp.where(h >= 0, h, LEAKY_SLOPE * h)
    return jnp.tanh(jnp.sum(h * w2, axis=1, keepdims=True) + b2)

  s_vals = []
  y1 = xd = None
  for i in range(n_layers):
    y1, y2 = x[:, :1], x[:, 1:]
    s = mlp(y1, ws1[i], bs1[i], ws2[i], bs2[i]) * scale[i]
    xd = y2 * jnp.exp(s) + mlp(y1, wt1[i], bt1[i], wt2[i], bt2[i])
    x = jnp.concatenate([y1, xd], axis=1)
    x = x[::-1, ::-1]                    # flip(dims=[1]) then flip(dims=[0])
    s_vals.append(s)
  return jnp.concatenate([y1, xd], axis=1), jnp.concatenate(s_vals, axis=0)


if __name__ == "__main__":
  N, HIDDEN, N_LAYERS = 256, 32, 4

  key = jax.random.PRNGKey(0)
  keys = jax.random.split(key, 10)
  x = jax.random.normal(keys[0], (N, 2), jnp.float32)

  # Deterministic synthetic parameters (shapes implied by the torch module):
  #   s[i]/t[i]: Linear(1, H) -> LeakyReLU -> Linear(H, 1) -> Tanh
  # Linear(1,H).weight (H,1) is stored transposed as (1,H); Linear(H,1).weight
  # is already (1,H). s_scale is (n_layers,), stored as (L,1,1) for broadcast.
  ws1 = jax.random.normal(keys[1], (N_LAYERS, 1, HIDDEN), jnp.float32) * 0.5
  bs1 = jax.random.normal(keys[2], (N_LAYERS, 1, HIDDEN), jnp.float32) * 0.1
  ws2 = jax.random.normal(keys[3], (N_LAYERS, 1, HIDDEN), jnp.float32) * 0.5
  bs2 = jax.random.normal(keys[4], (N_LAYERS, 1, 1), jnp.float32) * 0.1
  wt1 = jax.random.normal(keys[5], (N_LAYERS, 1, HIDDEN), jnp.float32) * 0.5
  bt1 = jax.random.normal(keys[6], (N_LAYERS, 1, HIDDEN), jnp.float32) * 0.1
  wt2 = jax.random.normal(keys[7], (N_LAYERS, 1, HIDDEN), jnp.float32) * 0.5
  bt2 = jax.random.normal(keys[8], (N_LAYERS, 1, 1), jnp.float32) * 0.1
  s_scale = jax.random.normal(keys[9], (N_LAYERS, 1, 1), jnp.float32)
  params = (ws1, bs1, ws2, bs2, wt1, bt1, wt2, bt2, s_scale)

  out, s_cat = normalizing_flow_forward(x, params)
  jax.block_until_ready((out, s_cat))

  ref_out, ref_s = reference_forward(x, params)
  assert out.shape == (N, 2) and s_cat.shape == (N_LAYERS * N, 1)
  assert jnp.allclose(out, ref_out, atol=1e-4, rtol=1e-4), "output mismatch"
  assert jnp.allclose(s_cat, ref_s, atol=1e-4, rtol=1e-4), "s_vals mismatch"
  print("KERNEL_OK")
</pallas_src>

<mosaic_0001>
module attributes {stable_mosaic.version = 11 : i64} {
  func.func @_nf_kernel(%arg0: i32, %arg1: memref<2x256xf32, #tpu.memory_space<vmem>>, %arg2: memref<4x64x3xf32, #tpu.memory_space<vmem>>, %arg3: memref<4x3xf32, #tpu.memory_space<smem>>, %arg4: memref<2x256xf32, #tpu.memory_space<vmem>>, %arg5: memref<4x256xf32, #tpu.memory_space<vmem>>) attributes {dimension_semantics = [#tpu.dimension_semantics<parallel>], iteration_bounds = array<i64: 1>, scalar_prefetch = 0 : i64, scratch_operands = 0 : i64, tpu.core_type = #tpu.core_type<tc>, window_params = [{transform_indices = @transform_0, window_bounds = array<i64: 2, 256>}, {pipeline_mode = #tpu.pipeline_mode<synchronous>, transform_indices = @transform_1, window_bounds = array<i64: 4, 64, 3>}, {transform_indices = @transform_2, window_bounds = array<i64: 4, 3>}, {transform_indices = @transform_3, window_bounds = array<i64: 2, 256>}, {transform_indices = @transform_4, window_bounds = array<i64: 4, 256>}]} {
    %c0 = arith.constant 0 : index
    %c0_0 = arith.constant 0 : index
    %0 = vector.load %arg1[%c0, %c0_0] : memref<2x256xf32, #tpu.memory_space<vmem>>, vector<1x256xf32>
    %c1 = arith.constant 1 : index
    %c0_1 = arith.constant 0 : index
    %1 = vector.load %arg1[%c1, %c0_1] : memref<2x256xf32, #tpu.memory_space<vmem>>, vector<1x256xf32>
    %c0_2 = arith.constant 0 : index
    %c0_3 = arith.constant 0 : index
    %c0_4 = arith.constant 0 : index
    %2 = vector.load %arg2[%c0_2, %c0_3, %c0_4] : memref<4x64x3xf32, #tpu.memory_space<vmem>>, vector<1x64x1xf32>
    %3 = vector.shape_cast %2 : vector<1x64x1xf32> to vector<64x1xf32>
    %c0_5 = arith.constant 0 : index
    %c0_6 = arith.constant 0 : index
    %c1_7 = arith.constant 1 : index
    %4 = vector.load %arg2[%c0_5, %c0_6, %c1_7] : memref<4x64x3xf32, #tpu.memory_space<vmem>>, vector<1x64x1xf32>
    %5 = vector.shape_cast %4 : vector<1x64x1xf32> to vector<64x1xf32>
    %c0_8 = arith.constant 0 : index
    %c0_9 = arith.constant 0 : index
    %c2 = arith.constant 2 : index
    %6 = vector.load %arg2[%c0_8, %c0_9, %c2] : memref<4x64x3xf32, #tpu.memory_space<vmem>>, vector<1x64x1xf32>
    %7 = vector.shape_cast %6 : vector<1x64x1xf32> to vector<64x1xf32>
    %8 = vector.broadcast %0 : vector<1x256xf32> to vector<64x256xf32>
    %9 = vector.broadcast %3 : vector<64x1xf32> to vector<64x256xf32>
    %10 = arith.mulf %8, %9 : vector<64x256xf32>
    %11 = vector.broadcast %5 : vector<64x1xf32> to vector<64x256xf32>
    %12 = arith.addf %10, %11 : vector<64x256xf32>
    %cst = arith.constant 0.000000e+00 : f32
    %13 = vector.broadcast %cst : f32 to vector<64x256xf32>
    %14 = arith.cmpf oge, %12, %13 : vector<64x256xf32>
    %cst_10 = arith.constant 0.00999999977 : f32
    %15 = vector.broadcast %cst_10 : f32 to vector<64x256xf32>
    %16 = arith.mulf %15, %12 : vector<64x256xf32>
    %17 = arith.select %14, %12, %16 : vector<64x256xi1>, vector<64x256xf32>
    %18 = vector.broadcast %7 : vector<64x1xf32> to vector<64x256xf32>
    %19 = arith.mulf %17, %18 : vector<64x256xf32>
    %20 = vector.extract_strided_slice %19 {offsets = [0, 0], sizes = [32, 256], strides = [1, 1]} : vector<64x256xf32> to vector<32x256xf32>
    %21 = vector.extract_strided_slice %20 {offsets = [0, 0], sizes = [8, 256], strides = [1, 1]} : vector<32x256xf32> to vector<8x256xf32>
    %22 = vector.extract_strided_slice %20 {offsets = [8, 0], sizes = [8, 256], strides = [1, 1]} : vector<32x256xf32> to vector<8x256xf32>
    %23 = arith.addf %21, %22 : vector<8x256xf32>
    %24 = vector.extract_strided_slice %20 {offsets = [16, 0], sizes = [8, 256], strides = [1, 1]} : vector<32x256xf32> to vector<8x256xf32>
    %25 = arith.addf %23, %24 : vector<8x256xf32>
    %26 = vector.extract_strided_slice %20 {offsets = [24, 0], sizes = [8, 256], strides = [1, 1]} : vector<32x256xf32> to vector<8x256xf32>
    %27 = arith.addf %25, %26 : vector<8x256xf32>
    %cst_11 = arith.constant dense<0.000000e+00> : vector<256xf32>
    %28 = vector.multi_reduction <add>, %27, %cst_11 [0] : vector<8x256xf32> to vector<256xf32>
    %29 = vector.shape_cast %28 : vector<256xf32> to vector<1x256xf32>
    %c0_12 = arith.constant 0 : index
    %c0_13 = arith.constant 0 : index
    %30 = memref.load %arg3[%c0_12, %c0_13] : memref<4x3xf32, #tpu.memory_space<smem>>
    %31 = vector.broadcast %30 : f32 to vector<1x256xf32>
    %32 = arith.addf %29, %31 : vector<1x256xf32>
    %33 = math.tanh %32 : vector<1x256xf32>
    %c0_14 = arith.constant 0 : index
    %c2_15 = arith.constant 2 : index
    %34 = memref.load %arg3[%c0_14, %c2_15] : memref<4x3xf32, #tpu.memory_space<smem>>
    %35 = vector.broadcast %34 : f32 to vector<1x256xf32>
    %36 = arith.mulf %33, %35 : vector<1x256xf32>
    %37 = vector.extract_strided_slice %19 {offsets = [32, 0], sizes = [32, 256], strides = [1, 1]} : vector<64x256xf32> to vector<32x256xf32>
    %38 = vector.extract_strided_slice %37 {offsets = [0, 0], sizes = [8, 256], strides = [1, 1]} : vector<32x256xf32> to vector<8x256xf32>
    %39 = vector.extract_strided_slice %37 {offsets = [8, 0], sizes = [8, 256], strides = [1, 1]} : vector<32x256xf32> to vector<8x256xf32>
    %40 = arith.addf %38, %39 : vector<8x256xf32>
    %41 = vector.extract_strided_slice %37 {offsets = [16, 0], sizes = [8, 256], strides = [1, 1]} : vector<32x256xf32> to vector<8x256xf32>
    %42 = arith.addf %40, %41 : vector<8x256xf32>
    %43 = vector.extract_strided_slice %37 {offsets = [24, 0], sizes = [8, 256], strides = [1, 1]} : vector<32x256xf32> to vector<8x256xf32>
    %44 = arith.addf %42, %43 : vector<8x256xf32>
    %cst_16 = arith.constant dense<0.000000e+00> : vector<256xf32>
    %45 = vector.multi_reduction <add>, %44, %cst_16 [0] : vector<8x256xf32> to vector<256xf32>
    %46 = vector.shape_cast %45 : vector<256xf32> to vector<1x256xf32>
    %c0_17 = arith.constant 0 : index
    %c1_18 = arith.constant 1 : index
    %47 = memref.load %arg3[%c0_17, %c1_18] : memref<4x3xf32, #tpu.memory_space<smem>>
    %48 = vector.broadcast %47 : f32 to vector<1x256xf32>
    %49 = arith.addf %46, %48 : vector<1x256xf32>
    %50 = math.tanh %49 : vector<1x256xf32>
    %51 = math.exp %36 : vector<1x256xf32>
    %52 = arith.mulf %1, %51 : vector<1x256xf32>
    %53 = arith.addf %52, %50 : vector<1x256xf32>
    %c0_19 = arith.constant 0 : index
    %c0_20 = arith.constant 0 : index
    %54 = vector.load %arg5[%c0_19, %c0_20] : memref<4x256xf32, #tpu.memory_space<vmem>>, vector<1x256xf32>
    tpu.vector_store %arg5[%c0_19, %c0_20], %36 {strides = array<i32>} : memref<4x256xf32, #tpu.memory_space<vmem>>, vector<1x256xf32>,
    %c1_21 = arith.constant 1 : index
    %c0_22 = arith.constant 0 : index
    %c0_23 = arith.constant 0 : index
    %55 = vector.load %arg2[%c1_21, %c0_22, %c0_23] : memref<4x64x3xf32, #tpu.memory_space<vmem>>, vector<1x64x1xf32>
    %56 = vector.shape_cast %55 : vector<1x64x1xf32> to vector<64x1xf32>
    %c1_24 = arith.constant 1 : index
    %c0_25 = arith.constant 0 : index
    %c1_26 = arith.constant 1 : index
    %57 = vector.load %arg2[%c1_24, %c0_25, %c1_26] : memref<4x64x3xf32, #tpu.memory_space<vmem>>, vector<1x64x1xf32>
    %58 = vector.shape_cast %57 : vector<1x64x1xf32> to vector<64x1xf32>
    %c1_27 = arith.constant 1 : index
    %c0_28 = arith.constant 0 : index
    %c2_29 = arith.constant 2 : index
    %59 = vector.load %arg2[%c1_27, %c0_28, %c2_29] : memref<4x64x3xf32, #tpu.memory_space<vmem>>, vector<1x64x1xf32>
    %60 = vector.shape_cast %59 : vector<1x64x1xf32> to vector<64x1xf32>
    %61 = vector.broadcast %53 : vector<1x256xf32> to vector<64x256xf32>
    %62 = vector.broadcast %56 : vector<64x1xf32> to vector<64x256xf32>
    %63 = arith.mulf %61, %62 : vector<64x256xf32>
    %64 = vector.broadcast %58 : vector<64x1xf32> to vector<64x256xf32>
    %65 = arith.addf %63, %64 : vector<64x256xf32>
    %cst_30 = arith.constant 0.000000e+00 : f32
    %66 = vector.broadcast %cst_30 : f32 to vector<64x256xf32>
    %67 = arith.cmpf oge, %65, %66 : vector<64x256xf32>
    %cst_31 = arith.constant 0.00999999977 : f32
    %68 = vector.broadcast %cst_31 : f32 to vector<64x256xf32>
    %69 = arith.mulf %68, %65 : vector<64x256xf32>
    %70 = arith.select %67, %65, %69 : vector<64x256xi1>, vector<64x256xf32>
    %71 = vector.broadcast %60 : vector<64x1xf32> to vector<64x256xf32>
    %72 = arith.mulf %70, %71 : vector<64x256xf32>
    %73 = vector.extract_strided_slice %72 {offsets = [0, 0], sizes = [32, 256], strides = [1, 1]} : vector<64x256xf32> to vector<32x256xf32>
    %74 = vector.extract_strided_slice %73 {offsets = [0, 0], sizes = [8, 256], strides = [1, 1]} : vector<32x256xf32> to vector<8x256xf32>
    %75 = vector.extract_strided_slice %73 {offsets = [8, 0], sizes = [8, 256], strides = [1, 1]} : vector<32x256xf32> to vector<8x256xf32>
    %76 = arith.addf %74, %75 : vector<8x256xf32>
    %77 = vector.extract_strided_slice %73 {offsets = [16, 0], sizes = [8, 256], strides = [1, 1]} : vector<32x256xf32> to vector<8x256xf32>
    %78 = arith.addf %76, %77 : vector<8x256xf32>
    %79 = vector.extract_strided_slice %73 {offsets = [24, 0], sizes = [8, 256], strides = [1, 1]} : vector<32x256xf32> to vector<8x256xf32>
    %80 = arith.addf %78, %79 : vector<8x256xf32>
    %cst_32 = arith.constant dense<0.000000e+00> : vector<256xf32>
    %81 = vector.multi_reduction <add>, %80, %cst_32 [0] : vector<8x256xf32> to vector<256xf32>
    %82 = vector.shape_cast %81 : vector<256xf32> to vector<1x256xf32>
    %c1_33 = arith.constant 1 : index
    %c0_34 = arith.constant 0 : index
    %83 = memref.load %arg3[%c1_33, %c0_34] : memref<4x3xf32, #tpu.memory_space<smem>>
    %84 = vector.broadcast %83 : f32 to vector<1x256xf32>
    %85 = arith.addf %82, %84 : vector<1x256xf32>
    %86 = math.tanh %85 : vector<1x256xf32>
    %c1_35 = arith.constant 1 : index
    %c2_36 = arith.constant 2 : index
    %87 = memref.load %arg3[%c1_35, %c2_36] : memref<4x3xf32, #tpu.memory_space<smem>>
    %88 = vector.broadcast %87 : f32 to vector<1x256xf32>
    %89 = arith.mulf %86, %88 : vector<1x256xf32>
    %90 = vector.extract_strided_slice %72 {offsets = [32, 0], sizes = [32, 256], strides = [1, 1]} : vector<64x256xf32> to vector<32x256xf32>
    %91 = vector.extract_strided_slice %90 {offsets = [0, 0], sizes = [8, 256], strides = [1, 1]} : vector<32x256xf32> to vector<8x256xf32>
    %92 = vector.extract_strided_slice %90 {offsets = [8, 0], sizes = [8, 256], strides = [1, 1]} : vector<32x256xf32> to vector<8x256xf32>
    %93 = arith.addf %91, %92 : vector<8x256xf32>
    %94 = vector.extract_strided_slice %90 {offsets = [16, 0], sizes = [8, 256], strides = [1, 1]} : vector<32x256xf32> to vector<8x256xf32>
    %95 = arith.addf %93, %94 : vector<8x256xf32>
    %96 = vector.extract_strided_slice %90 {offsets = [24, 0], sizes = [8, 256], strides = [1, 1]} : vector<32x256xf32> to vector<8x256xf32>
    %97 = arith.addf %95, %96 : vector<8x256xf32>
    %cst_37 = arith.constant dense<0.000000e+00> : vector<256xf32>
    %98 = vector.multi_reduction <add>, %97, %cst_37 [0] : vector<8x256xf32> to vector<256xf32>
    %99 = vector.shape_cast %98 : vector<256xf32> to vector<1x256xf32>
    %c1_38 = arith.constant 1 : index
    %c1_39 = arith.constant 1 : index
    %100 = memref.load %arg3[%c1_38, %c1_39] : memref<4x3xf32, #tpu.memory_space<smem>>
    %101 = vector.broadcast %100 : f32 to vector<1x256xf32>
    %102 = arith.addf %99, %101 : vector<1x256xf32>
    %103 = math.tanh %102 : vector<1x256xf32>
    %104 = math.exp %89 : vector<1x256xf32>
    %105 = arith.mulf %0, %104 : vector<1x256xf32>
    %106 = arith.addf %105, %103 : vector<1x256xf32>
    %c1_40 = arith.constant 1 : index
    %c0_41 = arith.constant 0 : index
    %107 = vector.load %arg5[%c1_40, %c0_41] : memref<4x256xf32, #tpu.memory_space<vmem>>, vector<1x256xf32>
    tpu.vector_store %arg5[%c1_40, %c0_41], %89 {strides = array<i32>} : memref<4x256xf32, #tpu.memory_space<vmem>>, vector<1x256xf32>,
    %c2_42 = arith.constant 2 : index
    %c0_43 = arith.constant 0 : index
    %c0_44 = arith.constant 0 : index
    %108 = vector.load %arg2[%c2_42, %c0_43, %c0_44] : memref<4x64x3xf32, #tpu.memory_space<vmem>>, vector<1x64x1xf32>
    %109 = vector.shape_cast %108 : vector<1x64x1xf32> to vector<64x1xf32>
    %c2_45 = arith.constant 2 : index
    %c0_46 = arith.constant 0 : index
    %c1_47 = arith.constant 1 : index
    %110 = vector.load %arg2[%c2_45, %c0_46, %c1_47] : memref<4x64x3xf32, #tpu.memory_space<vmem>>, vector<1x64x1xf32>
    %111 = vector.shape_cast %110 : vector<1x64x1xf32> to vector<64x1xf32>
    %c2_48 = arith.constant 2 : index
    %c0_49 = arith.constant 0 : index
    %c2_50 = arith.constant 2 : index
    %112 = vector.load %arg2[%c2_48, %c0_49, %c2_50] : memref<4x64x3xf32, #tpu.memory_space<vmem>>, vector<1x64x1xf32>
    %113 = vector.shape_cast %112 : vector<1x64x1xf32> to vector<64x1xf32>
    %114 = vector.broadcast %106 : vector<1x256xf32> to vector<64x256xf32>
    %115 = vector.broadcast %109 : vector<64x1xf32> to vector<64x256xf32>
    %116 = arith.mulf %114, %115 : vector<64x256xf32>
    %117 = vector.broadcast %111 : vector<64x1xf32> to vector<64x256xf32>
    %118 = arith.addf %116, %117 : vector<64x256xf32>
    %cst_51 = arith.constant 0.000000e+00 : f32
    %119 = vector.broadcast %cst_51 : f32 to vector<64x256xf32>
    %120 = arith.cmpf oge, %118, %119 : vector<64x256xf32>
    %cst_52 = arith.constant 0.00999999977 : f32
    %121 = vector.broadcast %cst_52 : f32 to vector<64x256xf32>
    %122 = arith.mulf %121, %118 : vector<64x256xf32>
    %123 = arith.select %120, %118, %122 : vector<64x256xi1>, vector<64x256xf32>
    %124 = vector.broadcast %113 : vector<64x1xf32> to vector<64x256xf32>
    %125 = arith.mulf %123, %124 : vector<64x256xf32>
    %126 = vector.extract_strided_slice %125 {offsets = [0, 0], sizes = [32, 256], strides = [1, 1]} : vector<64x256xf32> to vector<32x256xf32>
    %127 = vector.extract_strided_slice %126 {offsets = [0, 0], sizes = [8, 256], strides = [1, 1]} : vector<32x256xf32> to vector<8x256xf32>
    %128 = vector.extract_strided_slice %126 {offsets = [8, 0], sizes = [8, 256], strides = [1, 1]} : vector<32x256xf32> to vector<8x256xf32>
    %129 = arith.addf %127, %128 : vector<8x256xf32>
    %130 = vector.extract_strided_slice %126 {offsets = [16, 0], sizes = [8, 256], strides = [1, 1]} : vector<32x256xf32> to vector<8x256xf32>
    %131 = arith.addf %129, %130 : vector<8x256xf32>
    %132 = vector.extract_strided_slice %126 {offsets = [24, 0], sizes = [8, 256], strides = [1, 1]} : vector<32x256xf32> to vector<8x256xf32>
    %133 = arith.addf %131, %132 : vector<8x256xf32>
    %cst_53 = arith.constant dense<0.000000e+00> : vector<256xf32>
    %134 = vector.multi_reduction <add>, %133, %cst_53 [0] : vector<8x256xf32> to vector<256xf32>
    %135 = vector.shape_cast %134 : vector<256xf32> to vector<1x256xf32>
    %c2_54 = arith.constant 2 : index
    %c0_55 = arith.constant 0 : index
    %136 = memref.load %arg3[%c2_54, %c0_55] : memref<4x3xf32, #tpu.memory_space<smem>>
    %137 = vector.broadcast %136 : f32 to vector<1x256xf32>
    %138 = arith.addf %135, %137 : vector<1x256xf32>
    %139 = math.tanh %138 : vector<1x256xf32>
    %c2_56 = arith.constant 2 : index
    %c2_57 = arith.constant 2 : index
    %140 = memref.load %arg3[%c2_56, %c2_57] : memref<4x3xf32, #tpu.memory_space<smem>>
    %141 = vector.broadcast %140 : f32 to vector<1x256xf32>
    %142 = arith.mulf %139, %141 : vector<1x256xf32>
    %143 = vector.extract_strided_slice %125 {offsets = [32, 0], sizes = [32, 256], strides = [1, 1]} : vector<64x256xf32> to vector<32x256xf32>
    %144 = vector.extract_strided_slice %143 {offsets = [0, 0], sizes = [8, 256], strides = [1, 1]} : vector<32x256xf32> to vector<8x256xf32>
    %145 = vector.extract_strided_slice %143 {offsets = [8, 0], sizes = [8, 256], strides = [1, 1]} : vector<32x256xf32> to vector<8x256xf32>
    %146 = arith.addf %144, %145 : vector<8x256xf32>
    %147 = vector.extract_strided_slice %143 {offsets = [16, 0], sizes = [8, 256], strides = [1, 1]} : vector<32x256xf32> to vector<8x256xf32>
    %148 = arith.addf %146, %147 : vector<8x256xf32>
    %149 = vector.extract_strided_slice %143 {offsets = [24, 0], sizes = [8, 256], strides = [1, 1]} : vector<32x256xf32> to vector<8x256xf32>
    %150 = arith.addf %148, %149 : vector<8x256xf32>
    %cst_58 = arith.constant dense<0.000000e+00> : vector<256xf32>
    %151 = vector.multi_reduction <add>, %150, %cst_58 [0] : vector<8x256xf32> to vector<256xf32>
    %152 = vector.shape_cast %151 : vector<256xf32> to vector<1x256xf32>
    %c2_59 = arith.constant 2 : index
    %c1_60 = arith.constant 1 : index
    %153 = memref.load %arg3[%c2_59, %c1_60] : memref<4x3xf32, #tpu.memory_space<smem>>
    %154 = vector.broadcast %153 : f32 to vector<1x256xf32>
    %155 = arith.addf %152, %154 : vector<1x256xf32>
    %156 = math.tanh %155 : vector<1x256xf32>
    %157 = math.exp %142 : vector<1x256xf32>
    %158 = arith.mulf %53, %157 : vector<1x256xf32>
    %159 = arith.addf %158, %156 : vector<1x256xf32>
    %c2_61 = arith.constant 2 : index
    %c0_62 = arith.constant 0 : index
    %160 = vector.load %arg5[%c2_61, %c0_62] : memref<4x256xf32, #tpu.memory_space<vmem>>, vector<1x256xf32>
    tpu.vector_store %arg5[%c2_61, %c0_62], %142 {strides = array<i32>} : memref<4x256xf32, #tpu.memory_space<vmem>>, vector<1x256xf32>,
    %c3 = arith.constant 3 : index
    %c0_63 = arith.constant 0 : index
    %c0_64 = arith.constant 0 : index
    %161 = vector.load %arg2[%c3, %c0_63, %c0_64] : memref<4x64x3xf32, #tpu.memory_space<vmem>>, vector<1x64x1xf32>
    %162 = vector.shape_cast %161 : vector<1x64x1xf32> to vector<64x1xf32>
    %c3_65 = arith.constant 3 : index
    %c0_66 = arith.constant 0 : index
    %c1_67 = arith.constant 1 : index
    %163 = vector.load %arg2[%c3_65, %c0_66, %c1_67] : memref<4x64x3xf32, #tpu.memory_space<vmem>>, vector<1x64x1xf32>
    %164 = vector.shape_cast %163 : vector<1x64x1xf32> to vector<64x1xf32>
    %c3_68 = arith.constant 3 : index
    %c0_69 = arith.constant 0 : index
    %c2_70 = arith.constant 2 : index
    %165 = vector.load %arg2[%c3_68, %c0_69, %c2_70] : memref<4x64x3xf32, #tpu.memory_space<vmem>>, vector<1x64x1xf32>
    %166 = vector.shape_cast %165 : vector<1x64x1xf32> to vector<64x1xf32>
    %167 = vector.broadcast %159 : vector<1x256xf32> to vector<64x256xf32>
    %168 = vector.broadcast %162 : vector<64x1xf32> to vector<64x256xf32>
    %169 = arith.mulf %167, %168 : vector<64x256xf32>
    %170 = vector.broadcast %164 : vector<64x1xf32> to vector<64x256xf32>
    %171 = arith.addf %169, %170 : vector<64x256xf32>
    %cst_71 = arith.constant 0.000000e+00 : f32
    %172 = vector.broadcast %cst_71 : f32 to vector<64x256xf32>
    %173 = arith.cmpf oge, %171, %172 : vector<64x256xf32>
    %cst_72 = arith.constant 0.00999999977 : f32
    %174 = vector.broadcast %cst_72 : f32 to vector<64x256xf32>
    %175 = arith.mulf %174, %171 : vector<64x256xf32>
    %176 = arith.select %173, %171, %175 : vector<64x256xi1>, vector<64x256xf32>
    %177 = vector.broadcast %166 : vector<64x1xf32> to vector<64x256xf32>
    %178 = arith.mulf %176, %177 : vector<64x256xf32>
    %179 = vector.extract_strided_slice %178 {offsets = [0, 0], sizes = [32, 256], strides = [1, 1]} : vector<64x256xf32> to vector<32x256xf32>
    %180 = vector.extract_strided_slice %179 {offsets = [0, 0], sizes = [8, 256], strides = [1, 1]} : vector<32x256xf32> to vector<8x256xf32>
    %181 = vector.extract_strided_slice %179 {offsets = [8, 0], sizes = [8, 256], strides = [1, 1]} : vector<32x256xf32> to vector<8x256xf32>
    %182 = arith.addf %180, %181 : vector<8x256xf32>
    %183 = vector.extract_strided_slice %179 {offsets = [16, 0], sizes = [8, 256], strides = [1, 1]} : vector<32x256xf32> to vector<8x256xf32>
    %184 = arith.addf %182, %183 : vector<8x256xf32>
    %185 = vector.extract_strided_slice %179 {offsets = [24, 0], sizes = [8, 256], strides = [1, 1]} : vector<32x256xf32> to vector<8x256xf32>
    %186 = arith.addf %184, %185 : vector<8x256xf32>
    %cst_73 = arith.constant dense<0.000000e+00> : vector<256xf32>
    %187 = vector.multi_reduction <add>, %186, %cst_73 [0] : vector<8x256xf32> to vector<256xf32>
    %188 = vector.shape_cast %187 : vector<256xf32> to vector<1x256xf32>
    %c3_74 = arith.constant 3 : index
    %c0_75 = arith.constant 0 : index
    %189 = memref.load %arg3[%c3_74, %c0_75] : memref<4x3xf32, #tpu.memory_space<smem>>
    %190 = vector.broadcast %189 : f32 to vector<1x256xf32>
    %191 = arith.addf %188, %190 : vector<1x256xf32>
    %192 = math.tanh %191 : vector<1x256xf32>
    %c3_76 = arith.constant 3 : index
    %c2_77 = arith.constant 2 : index
    %193 = memref.load %arg3[%c3_76, %c2_77] : memref<4x3xf32, #tpu.memory_space<smem>>
    %194 = vector.broadcast %193 : f32 to vector<1x256xf32>
    %195 = arith.mulf %192, %194 : vector<1x256xf32>
    %196 = vector.extract_strided_slice %178 {offsets = [32, 0], sizes = [32, 256], strides = [1, 1]} : vector<64x256xf32> to vector<32x256xf32>
    %197 = vector.extract_strided_slice %196 {offsets = [0, 0], sizes = [8, 256], strides = [1, 1]} : vector<32x256xf32> to vector<8x256xf32>
    %198 = vector.extract_strided_slice %196 {offsets = [8, 0], sizes = [8, 256], strides = [1, 1]} : vector<32x256xf32> to vector<8x256xf32>
    %199 = arith.addf %197, %198 : vector<8x256xf32>
    %200 = vector.extract_strided_slice %196 {offsets = [16, 0], sizes = [8, 256], strides = [1, 1]} : vector<32x256xf32> to vector<8x256xf32>
    %201 = arith.addf %199, %200 : vector<8x256xf32>
    %202 = vector.extract_strided_slice %196 {offsets = [24, 0], sizes = [8, 256], strides = [1, 1]} : vector<32x256xf32> to vector<8x256xf32>
    %203 = arith.addf %201, %202 : vector<8x256xf32>
    %cst_78 = arith.constant dense<0.000000e+00> : vector<256xf32>
    %204 = vector.multi_reduction <add>, %203, %cst_78 [0] : vector<8x256xf32> to vector<256xf32>
    %205 = vector.shape_cast %204 : vector<256xf32> to vector<1x256xf32>
    %c3_79 = arith.constant 3 : index
    %c1_80 = arith.constant 1 : index
    %206 = memref.load %arg3[%c3_79, %c1_80] : memref<4x3xf32, #tpu.memory_space<smem>>
    %207 = vector.broadcast %206 : f32 to vector<1x256xf32>
    %208 = arith.addf %205, %207 : vector<1x256xf32>
    %209 = math.tanh %208 : vector<1x256xf32>
    %210 = math.exp %195 : vector<1x256xf32>
    %211 = arith.mulf %106, %210 : vector<1x256xf32>
    %212 = arith.addf %211, %209 : vector<1x256xf32>
    %c3_81 = arith.constant 3 : index
    %c0_82 = arith.constant 0 : index
    %213 = vector.load %arg5[%c3_81, %c0_82] : memref<4x256xf32, #tpu.memory_space<vmem>>, vector<1x256xf32>
    tpu.vector_store %arg5[%c3_81, %c0_82], %195 {strides = array<i32>} : memref<4x256xf32, #tpu.memory_space<vmem>>, vector<1x256xf32>,
    %214 = tpu.concatenate %159, %212 in 0 : vector<1x256xf32>, vector<1x256xf32> -> vector<2x256xf32>
    %c0_83 = arith.constant 0 : index
    %c0_84 = arith.constant 0 : index
    %215 = vector.load %arg4[%c0_83, %c0_84] : memref<2x256xf32, #tpu.memory_space<vmem>>, vector<2x256xf32>
    tpu.vector_store %arg4[%c0_83, %c0_84], %214 {strides = array<i32>} : memref<2x256xf32, #tpu.memory_space<vmem>>, vector<2x256xf32>,
    return
  }
  func.func @transform_0(%arg0: i32) -> (i32, i32) {
    %c0_i32 = arith.constant 0 : i32
    %c0_i32_0 = arith.constant 0 : i32
    return %c0_i32, %arg0 : i32, i32
  }
  func.func @transform_1(%arg0: i32) -> (i32, i32, i32) {
    %c0_i32 = arith.constant 0 : i32
    %c0_i32_0 = arith.constant 0 : i32
    %c0_i32_1 = arith.constant 0 : i32
    %c0_i32_2 = arith.constant 0 : i32
    return %c0_i32, %c0_i32_0, %c0_i32_1 : i32, i32, i32
  }
  func.func @transform_2(%arg0: i32) -> (i32, i32) {
    %c0_i32 = arith.constant 0 : i32
    %c0_i32_0 = arith.constant 0 : i32
    %c0_i32_1 = arith.constant 0 : i32
    return %c0_i32, %c0_i32_0 : i32, i32
  }
  func.func @transform_3(%arg0: i32) -> (i32, i32) {
    %c0_i32 = arith.constant 0 : i32
    %c0_i32_0 = arith.constant 0 : i32
    return %c0_i32, %arg0 : i32, i32
  }
  func.func @transform_4(%arg0: i32) -> (i32, i32) {
    %c0_i32 = arith.constant 0 : i32
    %c0_i32_0 = arith.constant 0 : i32
    return %c0_i32, %arg0 : i32, i32
  }
}

</mosaic_0001>

<llo_original>
// kernel: tpu_custom_call.1
$region0: #{tpu_custom_call.1}
  #allocation0 [shape = 'u32[]', space=smem, size = 0x4, offset = 0x4, fixed_abs, tag = 'smem constant byte address 0x4 - core index']
  #allocation1 [shape = 'u32[144,128]{1,0:T(1,128)}', space=vmem, size = 0x12000, scoped, tag = 'internal scratch']
  %s0 = inlined_call_operand.vmem [shape: f32[2,256], index: 0, kind: input, shape index: {}]
  %s1 = inlined_call_operand.vmem [shape: f32[4,64,3], index: 1, kind: input, shape index: {}]
  %s2 = inlined_call_operand.vmem [shape: f32[4,3], index: 2, kind: input, shape index: {}]
  %s3 = inlined_call_operand.hbm [shape: f32[2,256], index: 3, kind: output, shape index: {0}]
  %s4 = inlined_call_operand.hbm [shape: f32[4,256], index: 4, kind: output, shape index: {1}]
  %5 = xla_tuple %s3, %s4
  %s6 = sld [smem:[#allocation0]]
  $region34: #{tpu_custom_call.1} parent=0
    _
  %s8 = ssub.s32 1, %s6
  %s9 = scalar_select 0, %s8, %s6
  $region1: #{tpu_custom_call.1} parent=0
    #allocation2 [shape = 'u8[2048]{0}', space=smem, size = 0x800, scoped, tag = 'input window, operand 2, single buffered']
    #allocation3 [shape = 's32[1]{0}', space=sflag, size = 0x4, scoped, tag = 'scoped memory for tpu_custom_call.1']
    #allocation4 [shape = 's32[1]{0}', space=sflag, size = 0x4, scoped, tag = 'scoped memory for tpu_custom_call.1']
    #allocation5 [shape = 'u8[2048]{0}', space=vmem, size = 0x800, scoped, tag = 'output window, operand 0, single buffered']
    #allocation6 [shape = 'u8[4096]{0}', space=vmem, size = 0x1000, scoped, tag = 'output window, operand 1, single buffered']
    #allocation7 [shape = 's32[1]{0}', space=sflag, size = 0x4, scoped, tag = 'scoped memory for tpu_custom_call.1']
    %10 = vsyncpa [#allocation4], 0
    %11 = vsyncpa [#allocation3], 0
    %12 = vsyncpa [#allocation7], 0
    // Predicated region
    $region2: #{tpu_custom_call.1} parent=1 // pred_check
      _
    $region3: #{tpu_custom_call.1} parent=1 // pred_check_branch
      %14 = sbr.rel (0) target = $region5
    $region4: #{tpu_custom_call.1} parent=1 // pred_region
      _
    $region5: #{tpu_custom_call.1} parent=1 // pred_fallthru
      _
    // Predicated region
    $region6: #{tpu_custom_call.1} parent=1 // pred_check
      _
    $region7: #{tpu_custom_call.1} parent=1 // pred_check_branch
      %16 = sbr.rel (0) target = $region9
    $region8: #{tpu_custom_call.1} parent=1 // pred_region
      _
    $region9: #{tpu_custom_call.1} parent=1 // pred_fallthru
      _
    // Predicated region
    $region10: #{tpu_custom_call.1} parent=1 // pred_check
      _
    $region11: #{tpu_custom_call.1} parent=1 // pred_check_branch
      %18 = sbr.rel (0) target = $region13
    $region12: #{tpu_custom_call.1} parent=1 // pred_region
      %s20 = ssub.s32 64, 64
      %21 = vsyncadd [#allocation4], %s20
      %s23 = sshll.u32 %s2, 4
      %s24 = int_to_ptr.vmem [resolvable:$true] %s23
      %26 = dma.vmem_to_smem %s24, 64, [#allocation2], [#allocation4]
    $region13: #{tpu_custom_call.1} parent=1 // pred_fallthru
      _
    // Predicated region
    $region14: #{tpu_custom_call.1} parent=1 // pred_check
      _
    $region15: #{tpu_custom_call.1} parent=1 // pred_check_branch
      %28 = sbr.rel (0) target = $region17
    $region16: #{tpu_custom_call.1} parent=1 // pred_region
      %29 = dma.done [#allocation4], 64
    $region17: #{tpu_custom_call.1} parent=1 // pred_fallthru
      _
    %30 = sfence
    %v31 = vld [vmem:[%s0] ss:$2 sm:$0x3]
    %s32 = scalar_lea.vmem %s0, 1
    %v33 = vld [vmem:[%s32] ss:$2 sm:$0x3]
    %v34 = vld [vmem:[%s1] sm:$0xff]
    %v35 = vld [vmem:[%s1 + $0x8] sm:$0xff]
    %v36 = vld [vmem:[%s1 + $0x10] sm:$0xff]
    %v37 = vld [vmem:[%s1 + $0x18] sm:$0xff]
    %v38 = vld [vmem:[%s1 + $0x20] sm:$0xff]
    %v39 = vld [vmem:[%s1 + $0x28] sm:$0xff]
    %v40 = vld [vmem:[%s1 + $0x30] sm:$0xff]
    %v41 = vld [vmem:[%s1 + $0x38] sm:$0xff]
    %v43 = vlaneseq
    %v44 = vshrl.u32 %v43, 7
    %v45 = vsub.s32 0, %v44
    %v46 = vrot.slane %v31, %v45
    %v47 = vlaneseq
    %v48 = vshrl.u32 %v47, 7
    %v49 = vsub.s32 1, %v48
    %v50 = vrot.slane %v31, %v49
    %54 = vset.pattern.permute.xlu0 0
    %55 = vperm.xlu0 %54, %v34
    %v56 = vpop.permute.xlu0 %55
    %59 = vset.pattern.permute.xlu0 0
    %60 = vperm.xlu0 %59, %v35
    %v61 = vpop.permute.xlu0 %60
    %64 = vset.pattern.permute.xlu0 0
    %65 = vperm.xlu0 %64, %v36
    %v66 = vpop.permute.xlu0 %65
    %69 = vset.pattern.permute.xlu0 0
    %70 = vperm.xlu0 %69, %v37
    %v71 = vpop.permute.xlu0 %70
    %74 = vset.pattern.permute.xlu0 0
    %75 = vperm.xlu0 %74, %v38
    %v76 = vpop.permute.xlu0 %75
    %79 = vset.pattern.permute.xlu0 0
    %80 = vperm.xlu0 %79, %v39
    %v81 = vpop.permute.xlu0 %80
    %84 = vset.pattern.permute.xlu0 0
    %85 = vperm.xlu0 %84, %v40
    %v86 = vpop.permute.xlu0 %85
    %89 = vset.pattern.permute.xlu0 0
    %90 = vperm.xlu0 %89, %v41
    %v91 = vpop.permute.xlu0 %90
    %v93 = vmul.f32 %v46, %v56
    %v94 = vmul.f32 %v50, %v56
    %v95 = vmul.f32 %v46, %v61
    %v96 = vmul.f32 %v50, %v61
    %v97 = vmul.f32 %v46, %v66
    %v98 = vmul.f32 %v50, %v66
    %v99 = vmul.f32 %v46, %v71
    %v100 = vmul.f32 %v50, %v71
    %v101 = vmul.f32 %v46, %v76
    %v102 = vmul.f32 %v50, %v76
    %v103 = vmul.f32 %v46, %v81
    %v104 = vmul.f32 %v50, %v81
    %v105 = vmul.f32 %v46, %v86
    %v106 = vmul.f32 %v50, %v86
    %v107 = vmul.f32 %v46, %v91
    %v108 = vmul.f32 %v50, %v91
    %109 = vset.pattern.permute.xlu0 1
    %110 = vperm.xlu0 %109, %v34
    %v111 = vpop.permute.xlu0 %110
    %113 = vset.pattern.permute.xlu0 1
    %114 = vperm.xlu0 %113, %v35
    %v115 = vpop.permute.xlu0 %114
    %117 = vset.pattern.permute.xlu0 1
    %118 = vperm.xlu0 %117, %v36
    %v119 = vpop.permute.xlu0 %118
    %121 = vset.pattern.permute.xlu0 1
    %122 = vperm.xlu0 %121, %v37
    %v123 = vpop.permute.xlu0 %122
    %125 = vset.pattern.permute.xlu0 1
    %126 = vperm.xlu0 %125, %v38
    %v127 = vpop.permute.xlu0 %126
    %129 = vset.pattern.permute.xlu0 1
    %130 = vperm.xlu0 %129, %v39
    %v131 = vpop.permute.xlu0 %130
    %133 = vset.pattern.permute.xlu0 1
    %134 = vperm.xlu0 %133, %v40
    %v135 = vpop.permute.xlu0 %134
    %137 = vset.pattern.permute.xlu0 1
    %138 = vperm.xlu0 %137, %v41
    %v139 = vpop.permute.xlu0 %138
    %v141 = vadd.f32 %v93, %v111
    %v142 = vadd.f32 %v94, %v111
    %v143 = vadd.f32 %v95, %v115
    %v144 = vadd.f32 %v96, %v115
    %v145 = vadd.f32 %v97, %v119
    %v146 = vadd.f32 %v98, %v119
    %v147 = vadd.f32 %v99, %v123
    %v148 = vadd.f32 %v100, %v123
    %v149 = vadd.f32 %v101, %v127
    %v150 = vadd.f32 %v102, %v127
    %v151 = vadd.f32 %v103, %v131
    %v152 = vadd.f32 %v104, %v131
    %v153 = vadd.f32 %v105, %v135
    %v154 = vadd.f32 %v106, %v135
    %v155 = vadd.f32 %v107, %v139
    %v156 = vadd.f32 %v108, %v139
    %vm157 = vcmp.ge.f32.partialorder %v141, 0.0
    %vm158 = vcmp.ge.f32.partialorder %v142, 0.0
    %vm159 = vcmp.ge.f32.partialorder %v143, 0.0
    %vm160 = vcmp.ge.f32.partialorder %v144, 0.0
    %vm161 = vcmp.ge.f32.partialorder %v145, 0.0
    %vm162 = vcmp.ge.f32.partialorder %v146, 0.0
    %vm163 = vcmp.ge.f32.partialorder %v147, 0.0
    %vm164 = vcmp.ge.f32.partialorder %v148, 0.0
    %vm165 = vcmp.ge.f32.partialorder %v149, 0.0
    %vm166 = vcmp.ge.f32.partialorder %v150, 0.0
    %vm167 = vcmp.ge.f32.partialorder %v151, 0.0
    %vm168 = vcmp.ge.f32.partialorder %v152, 0.0
    %vm169 = vcmp.ge.f32.partialorder %v153, 0.0
    %vm170 = vcmp.ge.f32.partialorder %v154, 0.0
    %vm171 = vcmp.ge.f32.partialorder %v155, 0.0
    %vm172 = vcmp.ge.f32.partialorder %v156, 0.0
    %v173 = vmul.f32 %v141, 0.01
    %v174 = vmul.f32 %v142, 0.01
    %v175 = vmul.f32 %v143, 0.01
    %v176 = vmul.f32 %v144, 0.01
    %v177 = vmul.f32 %v145, 0.01
    %v178 = vmul.f32 %v146, 0.01
    %v179 = vmul.f32 %v147, 0.01
    %v180 = vmul.f32 %v148, 0.01
    %v181 = vmul.f32 %v149, 0.01
    %v182 = vmul.f32 %v150, 0.01
    %v183 = vmul.f32 %v151, 0.01
    %v184 = vmul.f32 %v152, 0.01
    %v185 = vmul.f32 %v153, 0.01
    %v186 = vmul.f32 %v154, 0.01
    %v187 = vmul.f32 %v155, 0.01
    %v188 = vmul.f32 %v156, 0.01
    %v189 = vsel %vm157, %v141, %v173
    %v190 = vsel %vm158, %v142, %v174
    %v191 = vsel %vm159, %v143, %v175
    %v192 = vsel %vm160, %v144, %v176
    %v193 = vsel %vm161, %v145, %v177
    %v194 = vsel %vm162, %v146, %v178
    %v195 = vsel %vm163, %v147, %v179
    %v196 = vsel %vm164, %v148, %v180
    %v197 = vsel %vm165, %v149, %v181
    %v198 = vsel %vm166, %v150, %v182
    %v199 = vsel %vm167, %v151, %v183
    %v200 = vsel %vm168, %v152, %v184
    %v201 = vsel %vm169, %v153, %v185
    %v202 = vsel %vm170, %v154, %v186
    %v203 = vsel %vm171, %v155, %v187
    %v204 = vsel %vm172, %v156, %v188
    %205 = vset.pattern.permute.xlu0 2
    %206 = vperm.xlu0 %205, %v34
    %v207 = vpop.permute.xlu0 %206
    %209 = vset.pattern.permute.xlu0 2
    %210 = vperm.xlu0 %209, %v35
    %v211 = vpop.permute.xlu0 %210
    %213 = vset.pattern.permute.xlu0 2
    %214 = vperm.xlu0 %213, %v36
    %v215 = vpop.permute.xlu0 %214
    %217 = vset.pattern.permute.xlu0 2
    %218 = vperm.xlu0 %217, %v37
    %v219 = vpop.permute.xlu0 %218
    %221 = vset.pattern.permute.xlu0 2
    %222 = vperm.xlu0 %221, %v38
    %v223 = vpop.permute.xlu0 %222
    %225 = vset.pattern.permute.xlu0 2
    %226 = vperm.xlu0 %225, %v39
    %v227 = vpop.permute.xlu0 %226
    %229 = vset.pattern.permute.xlu0 2
    %230 = vperm.xlu0 %229, %v40
    %v231 = vpop.permute.xlu0 %230
    %233 = vset.pattern.permute.xlu0 2
    %234 = vperm.xlu0 %233, %v41
    %v235 = vpop.permute.xlu0 %234
    %v237 = vmul.f32 %v189, %v207
    %v238 = vmul.f32 %v190, %v207
    %v239 = vmul.f32 %v191, %v211
    %v240 = vmul.f32 %v192, %v211
    %v241 = vmul.f32 %v193, %v215
    %v242 = vmul.f32 %v194, %v215
    %v243 = vmul.f32 %v195, %v219
    %v244 = vmul.f32 %v196, %v219
    %v245 = vmul.f32 %v197, %v223
    %v246 = vmul.f32 %v198, %v223
    %v247 = vmul.f32 %v199, %v227
    %v248 = vmul.f32 %v200, %v227
    %v249 = vmul.f32 %v201, %v231
    %v250 = vmul.f32 %v202, %v231
    %v251 = vmul.f32 %v203, %v235
    %v252 = vmul.f32 %v204, %v235
    %v253 = vadd.f32 %v237, %v239
    %v254 = vadd.f32 %v238, %v240
    %v255 = vadd.f32 %v253, %v241
    %v256 = vadd.f32 %v254, %v242
    %v257 = vadd.f32 %v255, %v243
    %v258 = vadd.f32 %v256, %v244
    %v259 = vrot.slane %v257, 4
    %v260 = vadd.f32 %v257, %v259
    %v261 = vrot.slane %v260, 2
    %v262 = vadd.f32 %v260, %v261
    %v263 = vrot.slane %v262, 1
    %v264 = vadd.f32 %v262, %v263
    %v265 = vrot.slane %v258, 4
    %v266 = vadd.f32 %v258, %v265
    %v267 = vrot.slane %v266, 2
    %v268 = vadd.f32 %v266, %v267
    %v269 = vrot.slane %v268, 1
    %v270 = vadd.f32 %v268, %v269
    %s271 = sld [smem:[#allocation2]]
    %v272 = vstv %s271
    %v273 = vadd.f32 %v264, %v272
    %v274 = vadd.f32 %v270, %v272
    %v275 = vtanh.pop %v273
    %v276 = vtanh.pop %v274
    %s277 = sld [smem:[#allocation2 + $0x2]]
    %v278 = vstv %s277
    %v279 = vmul.f32 %v275, %v278
    %v280 = vmul.f32 %v276, %v278
    %v281 = vadd.f32 %v245, %v247
    %v282 = vadd.f32 %v246, %v248
    %v283 = vadd.f32 %v281, %v249
    %v284 = vadd.f32 %v282, %v250
    %v285 = vadd.f32 %v283, %v251
    %v286 = vadd.f32 %v284, %v252
    %v287 = vrot.slane %v285, 4
    %v288 = vadd.f32 %v285, %v287
    %v289 = vrot.slane %v288, 2
    %v290 = vadd.f32 %v288, %v289
    %v291 = vrot.slane %v290, 1
    %v292 = vadd.f32 %v290, %v291
    %v293 = vrot.slane %v286, 4
    %v294 = vadd.f32 %v286, %v293
    %v295 = vrot.slane %v294, 2
    %v296 = vadd.f32 %v294, %v295
    %v297 = vrot.slane %v296, 1
    %v298 = vadd.f32 %v296, %v297
    %s299 = sld [smem:[#allocation2 + $0x1]]
    %v300 = vstv %s299
    %v301 = vadd.f32 %v292, %v300
    %v302 = vadd.f32 %v298, %v300
    %v303 = vtanh.pop %v301
    %v304 = vtanh.pop %v302
    %v305 = vmul.f32 %v279, 1.442695
    %v306 = vpow.pop %v305
    %v307 = vmul.f32 %v280, 1.442695
    %v308 = vpow.pop %v307
    %v311 = vcombine.low %v306, %v308
    %v313 = vunpack.c.l.s4 1966171168
    %v314 = vunpack.c.0.s8 %v313
    %v315 = vlaneseq
    %v316 = vshrl.u32 %v315, 7
    %v317 = vsub.s32 %v314, %v316
    %v318 = vrot.slane %v311, %v317
    %v320 = vunpack.c.l.s4 1966171168
    %v321 = vunpack.c.0.s8 %v320
    %v322 = vlaneseq
    %v323 = vshrl.u32 %v322, 7
    %v324 = vsub.s32 %v321, %v323
    %v325 = vrot.slane %v318, %v324
    %v327 = vmul.f32 %v33, %v325
    %v330 = vcombine.low %v303, %v304
    %v332 = vunpack.c.l.s4 1966171168
    %v333 = vunpack.c.0.s8 %v332
    %v334 = vlaneseq
    %v335 = vshrl.u32 %v334, 7
    %v336 = vsub.s32 %v333, %v335
    %v337 = vrot.slane %v330, %v336
    %v339 = vunpack.c.l.s4 1966171168
    %v340 = vunpack.c.0.s8 %v339
    %v341 = vlaneseq
    %v342 = vshrl.u32 %v341, 7
    %v343 = vsub.s32 %v340, %v342
    %v344 = vrot.slane %v337, %v343
    %v346 = vadd.f32 %v327, %v344
    %v349 = vcombine.low %v279, %v280
    %v351 = vunpack.c.l.s4 1966171168
    %v352 = vunpack.c.0.s8 %v351
    %v353 = vlaneseq
    %v354 = vshrl.u32 %v353, 7
    %v355 = vsub.s32 %v352, %v354
    %v356 = vrot.slane %v349, %v355
    %v358 = vunpack.c.l.s4 1966171168
    %v359 = vunpack.c.0.s8 %v358
    %v360 = vlaneseq
    %v361 = vshrl.u32 %v360, 7
    %v362 = vsub.s32 %v359, %v361
    %v363 = vrot.slane %v356, %v362
    %v365 = vlaneseq
    %vm366 = vcmp.ge.s32.totalorder %v365, 0
    %vm367 = vcmp.lt.s32.totalorder %v365, 256
    %vm368 = vmand %vm366, %vm367
    %369 = vst.msk [vmem:[#allocation6] ss:$4 sm:$0x3] %vm368, %v363
    %s370 = scalar_lea.vmem %s1, 64
    %v371 = vld [vmem:[%s370] sm:$0xff]
    %v372 = vld [vmem:[%s370 + $0x8] sm:$0xff]
    %v373 = vld [vmem:[%s370 + $0x10] sm:$0xff]
    %v374 = vld [vmem:[%s370 + $0x18] sm:$0xff]
    %v375 = vld [vmem:[%s370 + $0x20] sm:$0xff]
    %v376 = vld [vmem:[%s370 + $0x28] sm:$0xff]
    %v377 = vld [vmem:[%s370 + $0x30] sm:$0xff]
    %v378 = vld [vmem:[%s370 + $0x38] sm:$0xff]
    %v380 = vlaneseq
    %v381 = vshrl.u32 %v380, 7
    %v382 = vsub.s32 0, %v381
    %v383 = vrot.slane %v346, %v382
    %v384 = vlaneseq
    %v385 = vshrl.u32 %v384, 7
    %v386 = vsub.s32 1, %v385
    %v387 = vrot.slane %v346, %v386
    %391 = vset.pattern.permute.xlu0 0
    %392 = vperm.xlu0 %391, %v371
    %v393 = vpop.permute.xlu0 %392
    %396 = vset.pattern.permute.xlu0 0
    %397 = vperm.xlu0 %396, %v372
    %v398 = vpop.permute.xlu0 %397
    %401 = vset.pattern.permute.xlu0 0
    %402 = vperm.xlu0 %401, %v373
    %v403 = vpop.permute.xlu0 %402
    %406 = vset.pattern.permute.xlu0 0
    %407 = vperm.xlu0 %406, %v374
    %v408 = vpop.permute.xlu0 %407
    %411 = vset.pattern.permute.xlu0 0
    %412 = vperm.xlu0 %411, %v375
    %v413 = vpop.permute.xlu0 %412
    %416 = vset.pattern.permute.xlu0 0
    %417 = vperm.xlu0 %416, %v376
    %v418 = vpop.permute.xlu0 %417
    %421 = vset.pattern.permute.xlu0 0
    %422 = vperm.xlu0 %421, %v377
    %v423 = vpop.permute.xlu0 %422
    %426 = vset.pattern.permute.xlu0 0
    %427 = vperm.xlu0 %426, %v378
    %v428 = vpop.permute.xlu0 %427
    %v430 = vmul.f32 %v383, %v393
    %v431 = vmul.f32 %v387, %v393
    %v432 = vmul.f32 %v383, %v398
    %v433 = vmul.f32 %v387, %v398
    %v434 = vmul.f32 %v383, %v403
    %v435 = vmul.f32 %v387, %v403
    %v436 = vmul.f32 %v383, %v408
    %v437 = vmul.f32 %v387, %v408
    %v438 = vmul.f32 %v383, %v413
    %v439 = vmul.f32 %v387, %v413
    %v440 = vmul.f32 %v383, %v418
    %v441 = vmul.f32 %v387, %v418
    %v442 = vmul.f32 %v383, %v423
    %v443 = vmul.f32 %v387, %v423
    %v444 = vmul.f32 %v383, %v428
    %v445 = vmul.f32 %v387, %v428
    %446 = vset.pattern.permute.xlu0 1
    %447 = vperm.xlu0 %446, %v371
    %v448 = vpop.permute.xlu0 %447
    %450 = vset.pattern.permute.xlu0 1
    %451 = vperm.xlu0 %450, %v372
    %v452 = vpop.permute.xlu0 %451
    %454 = vset.pattern.permute.xlu0 1
    %455 = vperm.xlu0 %454, %v373
    %v456 = vpop.permute.xlu0 %455
    %458 = vset.pattern.permute.xlu0 1
    %459 = vperm.xlu0 %458, %v374
    %v460 = vpop.permute.xlu0 %459
    %462 = vset.pattern.permute.xlu0 1
    %463 = vperm.xlu0 %462, %v375
    %v464 = vpop.permute.xlu0 %463
    %466 = vset.pattern.permute.xlu0 1
    %467 = vperm.xlu0 %466, %v376
    %v468 = vpop.permute.xlu0 %467
    %470 = vset.pattern.permute.xlu0 1
    %471 = vperm.xlu0 %470, %v377
    %v472 = vpop.permute.xlu0 %471
    %474 = vset.pattern.permute.xlu0 1
    %475 = vperm.xlu0 %474, %v378
    %v476 = vpop.permute.xlu0 %475
    %v478 = vadd.f32 %v430, %v448
    %v479 = vadd.f32 %v431, %v448
    %v480 = vadd.f32 %v432, %v452
    %v481 = vadd.f32 %v433, %v452
    %v482 = vadd.f32 %v434, %v456
    %v483 = vadd.f32 %v435, %v456
    %v484 = vadd.f32 %v436, %v460
    %v485 = vadd.f32 %v437, %v460
    %v486 = vadd.f32 %v438, %v464
    %v487 = vadd.f32 %v439, %v464
    %v488 = vadd.f32 %v440, %v468
    %v489 = vadd.f32 %v441, %v468
    %v490 = vadd.f32 %v442, %v472
    %v491 = vadd.f32 %v443, %v472
    %v492 = vadd.f32 %v444, %v476
    %v493 = vadd.f32 %v445, %v476
    %vm494 = vcmp.ge.f32.partialorder %v478, 0.0
    %vm495 = vcmp.ge.f32.partialorder %v479, 0.0
    %vm496 = vcmp.ge.f32.partialorder %v480, 0.0
    %vm497 = vcmp.ge.f32.partialorder %v481, 0.0
    %vm498 = vcmp.ge.f32.partialorder %v482, 0.0
    %vm499 = vcmp.ge.f32.partialorder %v483, 0.0
    %vm500 = vcmp.ge.f32.partialorder %v484, 0.0
    %vm501 = vcmp.ge.f32.partialorder %v485, 0.0
    %vm502 = vcmp.ge.f32.partialorder %v486, 0.0
    %vm503 = vcmp.ge.f32.partialorder %v487, 0.0
    %vm504 = vcmp.ge.f32.partialorder %v488, 0.0
    %vm505 = vcmp.ge.f32.partialorder %v489, 0.0
    %vm506 = vcmp.ge.f32.partialorder %v490, 0.0
    %vm507 = vcmp.ge.f32.partialorder %v491, 0.0
    %vm508 = vcmp.ge.f32.partialorder %v492, 0.0
    %vm509 = vcmp.ge.f32.partialorder %v493, 0.0
    %v510 = vmul.f32 %v478, 0.01
    %v511 = vmul.f32 %v479, 0.01
    %v512 = vmul.f32 %v480, 0.01
    %v513 = vmul.f32 %v481, 0.01
    %v514 = vmul.f32 %v482, 0.01
    %v515 = vmul.f32 %v483, 0.01
    %v516 = vmul.f32 %v484, 0.01
    %v517 = vmul.f32 %v485, 0.01
    %v518 = vmul.f32 %v486, 0.01
    %v519 = vmul.f32 %v487, 0.01
    %v520 = vmul.f32 %v488, 0.01
    %v521 = vmul.f32 %v489, 0.01
    %v522 = vmul.f32 %v490, 0.01
    %v523 = vmul.f32 %v491, 0.01
    %v524 = vmul.f32 %v492, 0.01
    %v525 = vmul.f32 %v493, 0.01
    %v526 = vsel %vm494, %v478, %v510
    %v527 = vsel %vm495, %v479, %v511
    %v528 = vsel %vm496, %v480, %v512
    %v529 = vsel %vm497, %v481, %v513
    %v530 = vsel %vm498, %v482, %v514
    %v531 = vsel %vm499, %v483, %v515
    %v532 = vsel %vm500, %v484, %v516
    %v533 = vsel %vm501, %v485, %v517
    %v534 = vsel %vm502, %v486, %v518
    %v535 = vsel %vm503, %v487, %v519
    %v536 = vsel %vm504, %v488, %v520
    %v537 = vsel %vm505, %v489, %v521
    %v538 = vsel %vm506, %v490, %v522
    %v539 = vsel %vm507, %v491, %v523
    %v540 = vsel %vm508, %v492, %v524
    %v541 = vsel %vm509, %v493, %v525
    %542 = vset.pattern.permute.xlu0 2
    %543 = vperm.xlu0 %542, %v371
    %v544 = vpop.permute.xlu0 %543
    %546 = vset.pattern.permute.xlu0 2
    %547 = vperm.xlu0 %546, %v372
    %v548 = vpop.permute.xlu0 %547
    %550 = vset.pattern.permute.xlu0 2
    %551 = vperm.xlu0 %550, %v373
    %v552 = vpop.permute.xlu0 %551
    %554 = vset.pattern.permute.xlu0 2
    %555 = vperm.xlu0 %554, %v374
    %v556 = vpop.permute.xlu0 %555
    %558 = vset.pattern.permute.xlu0 2
    %559 = vperm.xlu0 %558, %v375
    %v560 = vpop.permute.xlu0 %559
    %562 = vset.pattern.permute.xlu0 2
    %563 = vperm.xlu0 %562, %v376
    %v564 = vpop.permute.xlu0 %563
    %566 = vset.pattern.permute.xlu0 2
    %567 = vperm.xlu0 %566, %v377
    %v568 = vpop.permute.xlu0 %567
    %570 = vset.pattern.permute.xlu0 2
    %571 = vperm.xlu0 %570, %v378
    %v572 = vpop.permute.xlu0 %571
    %v574 = vmul.f32 %v526, %v544
    %v575 = vmul.f32 %v527, %v544
    %v576 = vmul.f32 %v528, %v548
    %v577 = vmul.f32 %v529, %v548
    %v578 = vmul.f32 %v530, %v552
    %v579 = vmul.f32 %v531, %v552
    %v580 = vmul.f32 %v532, %v556
    %v581 = vmul.f32 %v533, %v556
    %v582 = vmul.f32 %v534, %v560
    %v583 = vmul.f32 %v535, %v560
    %v584 = vmul.f32 %v536, %v564
    %v585 = vmul.f32 %v537, %v564
    %v586 = vmul.f32 %v538, %v568
    %v587 = vmul.f32 %v539, %v568
    %v588 = vmul.f32 %v540, %v572
    %v589 = vmul.f32 %v541, %v572
    %v590 = vadd.f32 %v574, %v576
    %v591 = vadd.f32 %v575, %v577
    %v592 = vadd.f32 %v590, %v578
    %v593 = vadd.f32 %v591, %v579
    %v594 = vadd.f32 %v592, %v580
    %v595 = vadd.f32 %v593, %v581
    %v596 = vrot.slane %v594, 4
    %v597 = vadd.f32 %v594, %v596
    %v598 = vrot.slane %v597, 2
    %v599 = vadd.f32 %v597, %v598
    %v600 = vrot.slane %v599, 1
    %v601 = vadd.f32 %v599, %v600
    %v602 = vrot.slane %v595, 4
    %v603 = vadd.f32 %v595, %v602
    %v604 = vrot.slane %v603, 2
    %v605 = vadd.f32 %v603, %v604
    %v606 = vrot.slane %v605, 1
    %v607 = vadd.f32 %v605, %v606
    %s608 = sld [smem:[#allocation2 + $0x80]]
    %v609 = vstv %s608
    %v610 = vadd.f32 %v601, %v609
    %v611 = vadd.f32 %v607, %v609
    %v612 = vtanh.pop %v610
    %v613 = vtanh.pop %v611
    %s614 = sld [smem:[#allocation2 + $0x82]]
    %v615 = vstv %s614
    %v616 = vmul.f32 %v612, %v615
    %v617 = vmul.f32 %v613, %v615
    %v618 = vadd.f32 %v582, %v584
    %v619 = vadd.f32 %v583, %v585
    %v620 = vadd.f32 %v618, %v586
    %v621 = vadd.f32 %v619, %v587
    %v622 = vadd.f32 %v620, %v588
    %v623 = vadd.f32 %v621, %v589
    %v624 = vrot.slane %v622, 4
    %v625 = vadd.f32 %v622, %v624
    %v626 = vrot.slane %v625, 2
    %v627 = vadd.f32 %v625, %v626
    %v628 = vrot.slane %v627, 1
    %v629 = vadd.f32 %v627, %v628
    %v630 = vrot.slane %v623, 4
    %v631 = vadd.f32 %v623, %v630
    %v632 = vrot.slane %v631, 2
    %v633 = vadd.f32 %v631, %v632
    %v634 = vrot.slane %v633, 1
    %v635 = vadd.f32 %v633, %v634
    %s636 = sld [smem:[#allocation2 + $0x81]]
    %v637 = vstv %s636
    %v638 = vadd.f32 %v629, %v637
    %v639 = vadd.f32 %v635, %v637
    %v640 = vtanh.pop %v638
    %v641 = vtanh.pop %v639
    %v642 = vmul.f32 %v616, 1.442695
    %v643 = vpow.pop %v642
    %v644 = vmul.f32 %v617, 1.442695
    %v645 = vpow.pop %v644
    %v648 = vcombine.low %v643, %v645
    %v650 = vunpack.c.l.s4 1966171168
    %v651 = vunpack.c.0.s8 %v650
    %v652 = vlaneseq
    %v653 = vshrl.u32 %v652, 7
    %v654 = vsub.s32 %v651, %v653
    %v655 = vrot.slane %v648, %v654
    %v657 = vunpack.c.l.s4 1966171168
    %v658 = vunpack.c.0.s8 %v657
    %v659 = vlaneseq
    %v660 = vshrl.u32 %v659, 7
    %v661 = vsub.s32 %v658, %v660
    %v662 = vrot.slane %v655, %v661
    %v664 = vmul.f32 %v31, %v662
    %v667 = vcombine.low %v640, %v641
    %v669 = vunpack.c.l.s4 1966171168
    %v670 = vunpack.c.0.s8 %v669
    %v671 = vlaneseq
    %v672 = vshrl.u32 %v671, 7
    %v673 = vsub.s32 %v670, %v672
    %v674 = vrot.slane %v667, %v673
    %v676 = vunpack.c.l.s4 1966171168
    %v677 = vunpack.c.0.s8 %v676
    %v678 = vlaneseq
    %v679 = vshrl.u32 %v678, 7
    %v680 = vsub.s32 %v677, %v679
    %v681 = vrot.slane %v674, %v680
    %v683 = vadd.f32 %v664, %v681
    %v686 = vcombine.low %v616, %v617
    %v688 = vunpack.c.l.s4 1966171168
    %v689 = vunpack.c.0.s8 %v688
    %v690 = vlaneseq
    %v691 = vshrl.u32 %v690, 7
    %v692 = vsub.s32 %v689, %v691
    %v693 = vrot.slane %v686, %v692
    %v695 = vunpack.c.l.s4 1966171168
    %v696 = vunpack.c.0.s8 %v695
    %v697 = vlaneseq
    %v698 = vshrl.u32 %v697, 7
    %v699 = vsub.s32 %v696, %v698
    %v700 = vrot.slane %v693, %v699
    %s702 = scalar_lea.vmem [#allocation6], 1
    %703 = vst.msk [vmem:[%s702] ss:$4 sm:$0x3] %vm368, %v700
    %s704 = scalar_lea.vmem %s1, 128
    %v705 = vld [vmem:[%s704] sm:$0xff]
    %v706 = vld [vmem:[%s704 + $0x8] sm:$0xff]
    %v707 = vld [vmem:[%s704 + $0x10] sm:$0xff]
    %v708 = vld [vmem:[%s704 + $0x18] sm:$0xff]
    %v709 = vld [vmem:[%s704 + $0x20] sm:$0xff]
    %v710 = vld [vmem:[%s704 + $0x28] sm:$0xff]
    %v711 = vld [vmem:[%s704 + $0x30] sm:$0xff]
    %v712 = vld [vmem:[%s704 + $0x38] sm:$0xff]
    %v714 = vlaneseq
    %v715 = vshrl.u32 %v714, 7
    %v716 = vsub.s32 0, %v715
    %v717 = vrot.slane %v683, %v716
    %v718 = vlaneseq
    %v719 = vshrl.u32 %v718, 7
    %v720 = vsub.s32 1, %v719
    %v721 = vrot.slane %v683, %v720
    %725 = vset.pattern.permute.xlu0 0
    %726 = vperm.xlu0 %725, %v705
    %v727 = vpop.permute.xlu0 %726
    %730 = vset.pattern.permute.xlu0 0
    %731 = vperm.xlu0 %730, %v706
    %v732 = vpop.permute.xlu0 %731
    %735 = vset.pattern.permute.xlu0 0
    %736 = vperm.xlu0 %735, %v707
    %v737 = vpop.permute.xlu0 %736
    %740 = vset.pattern.permute.xlu0 0
    %741 = vperm.xlu0 %740, %v708
    %v742 = vpop.permute.xlu0 %741
    %745 = vset.pattern.permute.xlu0 0
    %746 = vperm.xlu0 %745, %v709
    %v747 = vpop.permute.xlu0 %746
    %750 = vset.pattern.permute.xlu0 0
    %751 = vperm.xlu0 %750, %v710
    %v752 = vpop.permute.xlu0 %751
    %755 = vset.pattern.permute.xlu0 0
    %756 = vperm.xlu0 %755, %v711
    %v757 = vpop.permute.xlu0 %756
    %760 = vset.pattern.permute.xlu0 0
    %761 = vperm.xlu0 %760, %v712
    %v762 = vpop.permute.xlu0 %761
    %v764 = vmul.f32 %v717, %v727
    %v765 = vmul.f32 %v721, %v727
    %v766 = vmul.f32 %v717, %v732
    %v767 = vmul.f32 %v721, %v732
    %v768 = vmul.f32 %v717, %v737
    %v769 = vmul.f32 %v721, %v737
    %v770 = vmul.f32 %v717, %v742
    %v771 = vmul.f32 %v721, %v742
    %v772 = vmul.f32 %v717, %v747
    %v773 = vmul.f32 %v721, %v747
    %v774 = vmul.f32 %v717, %v752
    %v775 = vmul.f32 %v721, %v752
    %v776 = vmul.f32 %v717, %v757
    %v777 = vmul.f32 %v721, %v757
    %v778 = vmul.f32 %v717, %v762
    %v779 = vmul.f32 %v721, %v762
    %780 = vset.pattern.permute.xlu0 1
    %781 = vperm.xlu0 %780, %v705
    %v782 = vpop.permute.xlu0 %781
    %784 = vset.pattern.permute.xlu0 1
    %785 = vperm.xlu0 %784, %v706
    %v786 = vpop.permute.xlu0 %785
    %788 = vset.pattern.permute.xlu0 1
    %789 = vperm.xlu0 %788, %v707
    %v790 = vpop.permute.xlu0 %789
    %792 = vset.pattern.permute.xlu0 1
    %793 = vperm.xlu0 %792, %v708
    %v794 = vpop.permute.xlu0 %793
    %796 = vset.pattern.permute.xlu0 1
    %797 = vperm.xlu0 %796, %v709
    %v798 = vpop.permute.xlu0 %797
    %800 = vset.pattern.permute.xlu0 1
    %801 = vperm.xlu0 %800, %v710
    %v802 = vpop.permute.xlu0 %801
    %804 = vset.pattern.permute.xlu0 1
    %805 = vperm.xlu0 %804, %v711
    %v806 = vpop.permute.xlu0 %805
    %808 = vset.pattern.permute.xlu0 1
    %809 = vperm.xlu0 %808, %v712
    %v810 = vpop.permute.xlu0 %809
    %v812 = vadd.f32 %v764, %v782
    %v813 = vadd.f32 %v765, %v782
    %v814 = vadd.f32 %v766, %v786
    %v815 = vadd.f32 %v767, %v786
    %v816 = vadd.f32 %v768, %v790
    %v817 = vadd.f32 %v769, %v790
    %v818 = vadd.f32 %v770, %v794
    %v819 = vadd.f32 %v771, %v794
    %v820 = vadd.f32 %v772, %v798
    %v821 = vadd.f32 %v773, %v798
    %v822 = vadd.f32 %v774, %v802
    %v823 = vadd.f32 %v775, %v802
    %v824 = vadd.f32 %v776, %v806
    %v825 = vadd.f32 %v777, %v806
    %v826 = vadd.f32 %v778, %v810
    %v827 = vadd.f32 %v779, %v810
    %vm828 = vcmp.ge.f32.partialorder %v812, 0.0
    %vm829 = vcmp.ge.f32.partialorder %v813, 0.0
    %vm830 = vcmp.ge.f32.partialorder %v814, 0.0
    %vm831 = vcmp.ge.f32.partialorder %v815, 0.0
    %vm832 = vcmp.ge.f32.partialorder %v816, 0.0
    %vm833 = vcmp.ge.f32.partialorder %v817, 0.0
    %vm834 = vcmp.ge.f32.partialorder %v818, 0.0
    %vm835 = vcmp.ge.f32.partialorder %v819, 0.0
    %vm836 = vcmp.ge.f32.partialorder %v820, 0.0
    %vm837 = vcmp.ge.f32.partialorder %v821, 0.0
    %vm838 = vcmp.ge.f32.partialorder %v822, 0.0
    %vm839 = vcmp.ge.f32.partialorder %v823, 0.0
    %vm840 = vcmp.ge.f32.partialorder %v824, 0.0
    %vm841 = vcmp.ge.f32.partialorder %v825, 0.0
    %vm842 = vcmp.ge.f32.partialorder %v826, 0.0
    %vm843 = vcmp.ge.f32.partialorder %v827, 0.0
    %v844 = vmul.f32 %v812, 0.01
    %v845 = vmul.f32 %v813, 0.01
    %v846 = vmul.f32 %v814, 0.01
    %v847 = vmul.f32 %v815, 0.01
    %v848 = vmul.f32 %v816, 0.01
    %v849 = vmul.f32 %v817, 0.01
    %v850 = vmul.f32 %v818, 0.01
    %v851 = vmul.f32 %v819, 0.01
    %v852 = vmul.f32 %v820, 0.01
    %v853 = vmul.f32 %v821, 0.01
    %v854 = vmul.f32 %v822, 0.01
    %v855 = vmul.f32 %v823, 0.01
    %v856 = vmul.f32 %v824, 0.01
    %v857 = vmul.f32 %v825, 0.01
    %v858 = vmul.f32 %v826, 0.01
    %v859 = vmul.f32 %v827, 0.01
    %v860 = vsel %vm828, %v812, %v844
    %v861 = vsel %vm829, %v813, %v845
    %v862 = vsel %vm830, %v814, %v846
    %v863 = vsel %vm831, %v815, %v847
    %v864 = vsel %vm832, %v816, %v848
    %v865 = vsel %vm833, %v817, %v849
    %v866 = vsel %vm834, %v818, %v850
    %v867 = vsel %vm835, %v819, %v851
    %v868 = vsel %vm836, %v820, %v852
    %v869 = vsel %vm837, %v821, %v853
    %v870 = vsel %vm838, %v822, %v854
    %v871 = vsel %vm839, %v823, %v855
    %v872 = vsel %vm840, %v824, %v856
    %v873 = vsel %vm841, %v825, %v857
    %v874 = vsel %vm842, %v826, %v858
    %v875 = vsel %vm843, %v827, %v859
    %876 = vset.pattern.permute.xlu0 2
    %877 = vperm.xlu0 %876, %v705
    %v878 = vpop.permute.xlu0 %877
    %880 = vset.pattern.permute.xlu0 2
    %881 = vperm.xlu0 %880, %v706
    %v882 = vpop.permute.xlu0 %881
    %884 = vset.pattern.permute.xlu0 2
    %885 = vperm.xlu0 %884, %v707
    %v886 = vpop.permute.xlu0 %885
    %888 = vset.pattern.permute.xlu0 2
    %889 = vperm.xlu0 %888, %v708
    %v890 = vpop.permute.xlu0 %889
    %892 = vset.pattern.permute.xlu0 2
    %893 = vperm.xlu0 %892, %v709
    %v894 = vpop.permute.xlu0 %893
    %896 = vset.pattern.permute.xlu0 2
    %897 = vperm.xlu0 %896, %v710
    %v898 = vpop.permute.xlu0 %897
    %900 = vset.pattern.permute.xlu0 2
    %901 = vperm.xlu0 %900, %v711
    %v902 = vpop.permute.xlu0 %901
    %904 = vset.pattern.permute.xlu0 2
    %905 = vperm.xlu0 %904, %v712
    %v906 = vpop.permute.xlu0 %905
    %v908 = vmul.f32 %v860, %v878
    %v909 = vmul.f32 %v861, %v878
    %v910 = vmul.f32 %v862, %v882
    %v911 = vmul.f32 %v863, %v882
    %v912 = vmul.f32 %v864, %v886
    %v913 = vmul.f32 %v865, %v886
    %v914 = vmul.f32 %v866, %v890
    %v915 = vmul.f32 %v867, %v890
    %v916 = vmul.f32 %v868, %v894
    %v917 = vmul.f32 %v869, %v894
    %v918 = vmul.f32 %v870, %v898
    %v919 = vmul.f32 %v871, %v898
    %v920 = vmul.f32 %v872, %v902
    %v921 = vmul.f32 %v873, %v902
    %v922 = vmul.f32 %v874, %v906
    %v923 = vmul.f32 %v875, %v906
    %v924 = vadd.f32 %v908, %v910
    %v925 = vadd.f32 %v909, %v911
    %v926 = vadd.f32 %v924, %v912
    %v927 = vadd.f32 %v925, %v913
    %v928 = vadd.f32 %v926, %v914
    %v929 = vadd.f32 %v927, %v915
    %v930 = vrot.slane %v928, 4
    %v931 = vadd.f32 %v928, %v930
    %v932 = vrot.slane %v931, 2
    %v933 = vadd.f32 %v931, %v932
    %v934 = vrot.slane %v933, 1
    %v935 = vadd.f32 %v933, %v934
    %v936 = vrot.slane %v929, 4
    %v937 = vadd.f32 %v929, %v936
    %v938 = vrot.slane %v937, 2
    %v939 = vadd.f32 %v937, %v938
    %v940 = vrot.slane %v939, 1
    %v941 = vadd.f32 %v939, %v940
    %s942 = sld [smem:[#allocation2 + $0x100]]
    %v943 = vstv %s942
    %v944 = vadd.f32 %v935, %v943
    %v945 = vadd.f32 %v941, %v943
    %v946 = vtanh.pop %v944
    %v947 = vtanh.pop %v945
    %s948 = sld [smem:[#allocation2 + $0x102]]
    %v949 = vstv %s948
    %v950 = vmul.f32 %v946, %v949
    %v951 = vmul.f32 %v947, %v949
    %v952 = vadd.f32 %v916, %v918
    %v953 = vadd.f32 %v917, %v919
    %v954 = vadd.f32 %v952, %v920
    %v955 = vadd.f32 %v953, %v921
    %v956 = vadd.f32 %v954, %v922
    %v957 = vadd.f32 %v955, %v923
    %v958 = vrot.slane %v956, 4
    %v959 = vadd.f32 %v956, %v958
    %v960 = vrot.slane %v959, 2
    %v961 = vadd.f32 %v959, %v960
    %v962 = vrot.slane %v961, 1
    %v963 = vadd.f32 %v961, %v962
    %v964 = vrot.slane %v957, 4
    %v965 = vadd.f32 %v957, %v964
    %v966 = vrot.slane %v965, 2
    %v967 = vadd.f32 %v965, %v966
    %v968 = vrot.slane %v967, 1
    %v969 = vadd.f32 %v967, %v968
    %s970 = sld [smem:[#allocation2 + $0x101]]
    %v971 = vstv %s970
    %v972 = vadd.f32 %v963, %v971
    %v973 = vadd.f32 %v969, %v971
    %v974 = vtanh.pop %v972
    %v975 = vtanh.pop %v973
    %v976 = vmul.f32 %v950, 1.442695
    %v977 = vpow.pop %v976
    %v978 = vmul.f32 %v951, 1.442695
    %v979 = vpow.pop %v978
    %v982 = vcombine.low %v977, %v979
    %v984 = vunpack.c.l.s4 1966171168
    %v985 = vunpack.c.0.s8 %v984
    %v986 = vlaneseq
    %v987 = vshrl.u32 %v986, 7
    %v988 = vsub.s32 %v985, %v987
    %v989 = vrot.slane %v982, %v988
    %v991 = vunpack.c.l.s4 1966171168
    %v992 = vunpack.c.0.s8 %v991
    %v993 = vlaneseq
    %v994 = vshrl.u32 %v993, 7
    %v995 = vsub.s32 %v992, %v994
    %v996 = vrot.slane %v989, %v995
    %v998 = vmul.f32 %v346, %v996
    %v1001 = vcombine.low %v974, %v975
    %v1003 = vunpack.c.l.s4 1966171168
    %v1004 = vunpack.c.0.s8 %v1003
    %v1005 = vlaneseq
    %v1006 = vshrl.u32 %v1005, 7
    %v1007 = vsub.s32 %v1004, %v1006
    %v1008 = vrot.slane %v1001, %v1007
    %v1010 = vunpack.c.l.s4 1966171168
    %v1011 = vunpack.c.0.s8 %v1010
    %v1012 = vlaneseq
    %v1013 = vshrl.u32 %v1012, 7
    %v1014 = vsub.s32 %v1011, %v1013
    %v1015 = vrot.slane %v1008, %v1014
    %v1017 = vadd.f32 %v998, %v1015
    %v1020 = vcombine.low %v950, %v951
    %v1022 = vunpack.c.l.s4 1966171168
    %v1023 = vunpack.c.0.s8 %v1022
    %v1024 = vlaneseq
    %v1025 = vshrl.u32 %v1024, 7
    %v1026 = vsub.s32 %v1023, %v1025
    %v1027 = vrot.slane %v1020, %v1026
    %v1029 = vunpack.c.l.s4 1966171168
    %v1030 = vunpack.c.0.s8 %v1029
    %v1031 = vlaneseq
    %v1032 = vshrl.u32 %v1031, 7
    %v1033 = vsub.s32 %v1030, %v1032
    %v1034 = vrot.slane %v1027, %v1033
    %s1036 = scalar_lea.vmem [#allocation6], 2
    %1037 = vst.msk [vmem:[%s1036] ss:$4 sm:$0x3] %vm368, %v1034
    %s1038 = scalar_lea.vmem %s1, 192
    %v1039 = vld [vmem:[%s1038] sm:$0xff]
    %v1040 = vld [vmem:[%s1038 + $0x8] sm:$0xff]
    %v1041 = vld [vmem:[%s1038 + $0x10] sm:$0xff]
    %v1042 = vld [vmem:[%s1038 + $0x18] sm:$0xff]
    %v1043 = vld [vmem:[%s1038 + $0x20] sm:$0xff]
    %v1044 = vld [vmem:[%s1038 + $0x28] sm:$0xff]
    %v1045 = vld [vmem:[%s1038 + $0x30] sm:$0xff]
    %v1046 = vld [vmem:[%s1038 + $0x38] sm:$0xff]
    %v1048 = vlaneseq
    %v1049 = vshrl.u32 %v1048, 7
    %v1050 = vsub.s32 0, %v1049
    %v1051 = vrot.slane %v1017, %v1050
    %v1052 = vlaneseq
    %v1053 = vshrl.u32 %v1052, 7
    %v1054 = vsub.s32 1, %v1053
    %v1055 = vrot.slane %v1017, %v1054
    %1059 = vset.pattern.permute.xlu0 0
    %1060 = vperm.xlu0 %1059, %v1039
    %v1061 = vpop.permute.xlu0 %1060
    %1064 = vset.pattern.permute.xlu0 0
    %1065 = vperm.xlu0 %1064, %v1040
    %v1066 = vpop.permute.xlu0 %1065
    %1069 = vset.pattern.permute.xlu0 0
    %1070 = vperm.xlu0 %1069, %v1041
    %v1071 = vpop.permute.xlu0 %1070
    %1074 = vset.pattern.permute.xlu0 0
    %1075 = vperm.xlu0 %1074, %v1042
    %v1076 = vpop.permute.xlu0 %1075
    %1079 = vset.pattern.permute.xlu0 0
    %1080 = vperm.xlu0 %1079, %v1043
    %v1081 = vpop.permute.xlu0 %1080
    %1084 = vset.pattern.permute.xlu0 0
    %1085 = vperm.xlu0 %1084, %v1044
    %v1086 = vpop.permute.xlu0 %1085
    %1089 = vset.pattern.permute.xlu0 0
    %1090 = vperm.xlu0 %1089, %v1045
    %v1091 = vpop.permute.xlu0 %1090
    %1094 = vset.pattern.permute.xlu0 0
    %1095 = vperm.xlu0 %1094, %v1046
    %v1096 = vpop.permute.xlu0 %1095
    %v1098 = vmul.f32 %v1051, %v1061
    %v1099 = vmul.f32 %v1055, %v1061
    %v1100 = vmul.f32 %v1051, %v1066
    %v1101 = vmul.f32 %v1055, %v1066
    %v1102 = vmul.f32 %v1051, %v1071
    %v1103 = vmul.f32 %v1055, %v1071
    %v1104 = vmul.f32 %v1051, %v1076
    %v1105 = vmul.f32 %v1055, %v1076
    %v1106 = vmul.f32 %v1051, %v1081
    %v1107 = vmul.f32 %v1055, %v1081
    %v1108 = vmul.f32 %v1051, %v1086
    %v1109 = vmul.f32 %v1055, %v1086
    %v1110 = vmul.f32 %v1051, %v1091
    %v1111 = vmul.f32 %v1055, %v1091
    %v1112 = vmul.f32 %v1051, %v1096
    %v1113 = vmul.f32 %v1055, %v1096
    %1114 = vset.pattern.permute.xlu0 1
    %1115 = vperm.xlu0 %1114, %v1039
    %v1116 = vpop.permute.xlu0 %1115
    %1118 = vset.pattern.permute.xlu0 1
    %1119 = vperm.xlu0 %1118, %v1040
    %v1120 = vpop.permute.xlu0 %1119
    %1122 = vset.pattern.permute.xlu0 1
    %1123 = vperm.xlu0 %1122, %v1041
    %v1124 = vpop.permute.xlu0 %1123
    %1126 = vset.pattern.permute.xlu0 1
    %1127 = vperm.xlu0 %1126, %v1042
    %v1128 = vpop.permute.xlu0 %1127
    %1130 = vset.pattern.permute.xlu0 1
    %1131 = vperm.xlu0 %1130, %v1043
    %v1132 = vpop.permute.xlu0 %1131
    %1134 = vset.pattern.permute.xlu0 1
    %1135 = vperm.xlu0 %1134, %v1044
    %v1136 = vpop.permute.xlu0 %1135
    %1138 = vset.pattern.permute.xlu0 1
    %1139 = vperm.xlu0 %1138, %v1045
    %v1140 = vpop.permute.xlu0 %1139
    %1142 = vset.pattern.permute.xlu0 1
    %1143 = vperm.xlu0 %1142, %v1046
    %v1144 = vpop.permute.xlu0 %1143
    %v1146 = vadd.f32 %v1098, %v1116
    %v1147 = vadd.f32 %v1099, %v1116
    %v1148 = vadd.f32 %v1100, %v1120
    %v1149 = vadd.f32 %v1101, %v1120
    %v1150 = vadd.f32 %v1102, %v1124
    %v1151 = vadd.f32 %v1103, %v1124
    %v1152 = vadd.f32 %v1104, %v1128
    %v1153 = vadd.f32 %v1105, %v1128
    %v1154 = vadd.f32 %v1106, %v1132
    %v1155 = vadd.f32 %v1107, %v1132
    %v1156 = vadd.f32 %v1108, %v1136
    %v1157 = vadd.f32 %v1109, %v1136
    %v1158 = vadd.f32 %v1110, %v1140
    %v1159 = vadd.f32 %v1111, %v1140
    %v1160 = vadd.f32 %v1112, %v1144
    %v1161 = vadd.f32 %v1113, %v1144
    %vm1162 = vcmp.ge.f32.partialorder %v1146, 0.0
    %vm1163 = vcmp.ge.f32.partialorder %v1147, 0.0
    %vm1164 = vcmp.ge.f32.partialorder %v1148, 0.0
    %vm1165 = vcmp.ge.f32.partialorder %v1149, 0.0
    %vm1166 = vcmp.ge.f32.partialorder %v1150, 0.0
    %vm1167 = vcmp.ge.f32.partialorder %v1151, 0.0
    %vm1168 = vcmp.ge.f32.partialorder %v1152, 0.0
    %vm1169 = vcmp.ge.f32.partialorder %v1153, 0.0
    %vm1170 = vcmp.ge.f32.partialorder %v1154, 0.0
    %vm1171 = vcmp.ge.f32.partialorder %v1155, 0.0
    %vm1172 = vcmp.ge.f32.partialorder %v1156, 0.0
    %vm1173 = vcmp.ge.f32.partialorder %v1157, 0.0
    %vm1174 = vcmp.ge.f32.partialorder %v1158, 0.0
    %vm1175 = vcmp.ge.f32.partialorder %v1159, 0.0
    %vm1176 = vcmp.ge.f32.partialorder %v1160, 0.0
    %vm1177 = vcmp.ge.f32.partialorder %v1161, 0.0
    %v1178 = vmul.f32 %v1146, 0.01
    %v1179 = vmul.f32 %v1147, 0.01
    %v1180 = vmul.f32 %v1148, 0.01
    %v1181 = vmul.f32 %v1149, 0.01
    %v1182 = vmul.f32 %v1150, 0.01
    %v1183 = vmul.f32 %v1151, 0.01
    %v1184 = vmul.f32 %v1152, 0.01
    %v1185 = vmul.f32 %v1153, 0.01
    %v1186 = vmul.f32 %v1154, 0.01
    %v1187 = vmul.f32 %v1155, 0.01
    %v1188 = vmul.f32 %v1156, 0.01
    %v1189 = vmul.f32 %v1157, 0.01
    %v1190 = vmul.f32 %v1158, 0.01
    %v1191 = vmul.f32 %v1159, 0.01
    %v1192 = vmul.f32 %v1160, 0.01
    %v1193 = vmul.f32 %v1161, 0.01
    %v1194 = vsel %vm1162, %v1146, %v1178
    %v1195 = vsel %vm1163, %v1147, %v1179
    %v1196 = vsel %vm1164, %v1148, %v1180
    %v1197 = vsel %vm1165, %v1149, %v1181
    %v1198 = vsel %vm1166, %v1150, %v1182
    %v1199 = vsel %vm1167, %v1151, %v1183
    %v1200 = vsel %vm1168, %v1152, %v1184
    %v1201 = vsel %vm1169, %v1153, %v1185
    %v1202 = vsel %vm1170, %v1154, %v1186
    %v1203 = vsel %vm1171, %v1155, %v1187
    %v1204 = vsel %vm1172, %v1156, %v1188
    %v1205 = vsel %vm1173, %v1157, %v1189
    %v1206 = vsel %vm1174, %v1158, %v1190
    %v1207 = vsel %vm1175, %v1159, %v1191
    %v1208 = vsel %vm1176, %v1160, %v1192
    %v1209 = vsel %vm1177, %v1161, %v1193
    %1210 = vset.pattern.permute.xlu0 2
    %1211 = vperm.xlu0 %1210, %v1039
    %v1212 = vpop.permute.xlu0 %1211
    %1214 = vset.pattern.permute.xlu0 2
    %1215 = vperm.xlu0 %1214, %v1040
    %v1216 = vpop.permute.xlu0 %1215
    %1218 = vset.pattern.permute.xlu0 2
    %1219 = vperm.xlu0 %1218, %v1041
    %v1220 = vpop.permute.xlu0 %1219
    %1222 = vset.pattern.permute.xlu0 2
    %1223 = vperm.xlu0 %1222, %v1042
    %v1224 = vpop.permute.xlu0 %1223
    %1226 = vset.pattern.permute.xlu0 2
    %1227 = vperm.xlu0 %1226, %v1043
    %v1228 = vpop.permute.xlu0 %1227
    %1230 = vset.pattern.permute.xlu0 2
    %1231 = vperm.xlu0 %1230, %v1044
    %v1232 = vpop.permute.xlu0 %1231
    %1234 = vset.pattern.permute.xlu0 2
    %1235 = vperm.xlu0 %1234, %v1045
    %v1236 = vpop.permute.xlu0 %1235
    %1238 = vset.pattern.permute.xlu0 2
    %1239 = vperm.xlu0 %1238, %v1046
    %v1240 = vpop.permute.xlu0 %1239
    %v1242 = vmul.f32 %v1194, %v1212
    %v1243 = vmul.f32 %v1195, %v1212
    %v1244 = vmul.f32 %v1196, %v1216
    %v1245 = vmul.f32 %v1197, %v1216
    %v1246 = vmul.f32 %v1198, %v1220
    %v1247 = vmul.f32 %v1199, %v1220
    %v1248 = vmul.f32 %v1200, %v1224
    %v1249 = vmul.f32 %v1201, %v1224
    %v1250 = vmul.f32 %v1202, %v1228
    %v1251 = vmul.f32 %v1203, %v1228
    %v1252 = vmul.f32 %v1204, %v1232
    %v1253 = vmul.f32 %v1205, %v1232
    %v1254 = vmul.f32 %v1206, %v1236
    %v1255 = vmul.f32 %v1207, %v1236
    %v1256 = vmul.f32 %v1208, %v1240
    %v1257 = vmul.f32 %v1209, %v1240
    %v1258 = vadd.f32 %v1242, %v1244
    %v1259 = vadd.f32 %v1243, %v1245
    %v1260 = vadd.f32 %v1258, %v1246
    %v1261 = vadd.f32 %v1259, %v1247
    %v1262 = vadd.f32 %v1260, %v1248
    %v1263 = vadd.f32 %v1261, %v1249
    %v1264 = vrot.slane %v1262, 4
    %v1265 = vadd.f32 %v1262, %v1264
    %v1266 = vrot.slane %v1265, 2
    %v1267 = vadd.f32 %v1265, %v1266
    %v1268 = vrot.slane %v1267, 1
    %v1269 = vadd.f32 %v1267, %v1268
    %v1270 = vrot.slane %v1263, 4
    %v1271 = vadd.f32 %v1263, %v1270
    %v1272 = vrot.slane %v1271, 2
    %v1273 = vadd.f32 %v1271, %v1272
    %v1274 = vrot.slane %v1273, 1
    %v1275 = vadd.f32 %v1273, %v1274
    %s1276 = sld [smem:[#allocation2 + $0x180]]
    %v1277 = vstv %s1276
    %v1278 = vadd.f32 %v1269, %v1277
    %v1279 = vadd.f32 %v1275, %v1277
    %v1280 = vtanh.pop %v1278
    %v1281 = vtanh.pop %v1279
    %s1282 = sld [smem:[#allocation2 + $0x182]]
    %v1283 = vstv %s1282
    %v1284 = vmul.f32 %v1280, %v1283
    %v1285 = vmul.f32 %v1281, %v1283
    %v1286 = vadd.f32 %v1250, %v1252
    %v1287 = vadd.f32 %v1251, %v1253
    %v1288 = vadd.f32 %v1286, %v1254
    %v1289 = vadd.f32 %v1287, %v1255
    %v1290 = vadd.f32 %v1288, %v1256
    %v1291 = vadd.f32 %v1289, %v1257
    %v1292 = vrot.slane %v1290, 4
    %v1293 = vadd.f32 %v1290, %v1292
    %v1294 = vrot.slane %v1293, 2
    %v1295 = vadd.f32 %v1293, %v1294
    %v1296 = vrot.slane %v1295, 1
    %v1297 = vadd.f32 %v1295, %v1296
    %v1298 = vrot.slane %v1291, 4
    %v1299 = vadd.f32 %v1291, %v1298
    %v1300 = vrot.slane %v1299, 2
    %v1301 = vadd.f32 %v1299, %v1300
    %v1302 = vrot.slane %v1301, 1
    %v1303 = vadd.f32 %v1301, %v1302
    %s1304 = sld [smem:[#allocation2 + $0x181]]
    %v1305 = vstv %s1304
    %v1306 = vadd.f32 %v1297, %v1305
    %v1307 = vadd.f32 %v1303, %v1305
    %v1308 = vtanh.pop %v1306
    %v1309 = vtanh.pop %v1307
    %v1310 = vmul.f32 %v1284, 1.442695
    %v1311 = vpow.pop %v1310
    %v1312 = vmul.f32 %v1285, 1.442695
    %v1313 = vpow.pop %v1312
    %v1316 = vcombine.low %v1311, %v1313
    %v1318 = vunpack.c.l.s4 1966171168
    %v1319 = vunpack.c.0.s8 %v1318
    %v1320 = vlaneseq
    %v1321 = vshrl.u32 %v1320, 7
    %v1322 = vsub.s32 %v1319, %v1321
    %v1323 = vrot.slane %v1316, %v1322
    %v1325 = vunpack.c.l.s4 1966171168
    %v1326 = vunpack.c.0.s8 %v1325
    %v1327 = vlaneseq
    %v1328 = vshrl.u32 %v1327, 7
    %v1329 = vsub.s32 %v1326, %v1328
    %v1330 = vrot.slane %v1323, %v1329
    %v1332 = vmul.f32 %v683, %v1330
    %v1335 = vcombine.low %v1308, %v1309
    %v1337 = vunpack.c.l.s4 1966171168
    %v1338 = vunpack.c.0.s8 %v1337
    %v1339 = vlaneseq
    %v1340 = vshrl.u32 %v1339, 7
    %v1341 = vsub.s32 %v1338, %v1340
    %v1342 = vrot.slane %v1335, %v1341
    %v1344 = vunpack.c.l.s4 1966171168
    %v1345 = vunpack.c.0.s8 %v1344
    %v1346 = vlaneseq
    %v1347 = vshrl.u32 %v1346, 7
    %v1348 = vsub.s32 %v1345, %v1347
    %v1349 = vrot.slane %v1342, %v1348
    %v1351 = vadd.f32 %v1332, %v1349
    %v1354 = vcombine.low %v1284, %v1285
    %v1356 = vunpack.c.l.s4 1966171168
    %v1357 = vunpack.c.0.s8 %v1356
    %v1358 = vlaneseq
    %v1359 = vshrl.u32 %v1358, 7
    %v1360 = vsub.s32 %v1357, %v1359
    %v1361 = vrot.slane %v1354, %v1360
    %v1363 = vunpack.c.l.s4 1966171168
    %v1364 = vunpack.c.0.s8 %v1363
    %v1365 = vlaneseq
    %v1366 = vshrl.u32 %v1365, 7
    %v1367 = vsub.s32 %v1364, %v1366
    %v1368 = vrot.slane %v1361, %v1367
    %s1370 = scalar_lea.vmem [#allocation6], 3
    %1371 = vst.msk [vmem:[%s1370] ss:$4 sm:$0x3] %vm368, %v1368
    %v1373 = vlaneseq
    %v1374 = vshrl.u32 %v1373, 7
    %v1375 = vsub.s32 0, %v1374
    %v1376 = vrot.slane %v1351, %v1375
    %v1377 = vlaneseq
    %v1378 = vshrl.u32 %v1377, 7
    %v1379 = vsub.s32 1, %v1378
    %v1380 = vrot.slane %v1351, %v1379
    %vm1383 = vcmask 1040384
    %v1384 = vsel %vm1383, %v1051, %v1376
    %v1385 = vsel %vm1383, %v1055, %v1380
    %v1388 = vcombine.low %v1384, %v1385
    %v1390 = vunpack.c.l.s4 1983009808
    %v1391 = vunpack.c.0.s8 %v1390
    %v1392 = vlaneseq
    %v1393 = vshrl.u32 %v1392, 7
    %v1394 = vsub.s32 %v1391, %v1393
    %v1395 = vrot.slane %v1388, %v1394
    %1397 = vst [vmem:[#allocation5] sm:$0xf] %v1395
    // Predicated region
    $region18: #{tpu_custom_call.1} parent=1 // pred_check
      _
    $region19: #{tpu_custom_call.1} parent=1 // pred_check_branch
      %1399 = sbr.rel (0) target = $region21
    $region20: #{tpu_custom_call.1} parent=1 // pred_region
      %s1401 = ssub.s32 64, 64
      %1402 = vsyncadd [#allocation3], %s1401
      %s1404 = sshll.u32 [#allocation5], 4
      %s1405 = int_to_ptr.vmem [resolvable:$true] %s1404
      %1407 = dma.vmem_to_hbm [thread:$0]  %s1405, 64, %s3, [#allocation3]
    $region21: #{tpu_custom_call.1} parent=1 // pred_fallthru
      _
    // Predicated region
    $region22: #{tpu_custom_call.1} parent=1 // pred_check
      _
    $region23: #{tpu_custom_call.1} parent=1 // pred_check_branch
      %1409 = sbr.rel (0) target = $region25
    $region24: #{tpu_custom_call.1} parent=1 // pred_region
      %s1411 = ssub.s32 128, 128
      %1412 = vsyncadd [#allocation7], %s1411
      %s1414 = sshll.u32 [#allocation6], 4
      %s1415 = int_to_ptr.vmem [resolvable:$true] %s1414
      %1417 = dma.vmem_to_hbm [thread:$0]  %s1415, 128, %s4, [#allocation7]
    $region25: #{tpu_custom_call.1} parent=1 // pred_fallthru
      _
    // Predicated region
    $region26: #{tpu_custom_call.1} parent=1 // pred_check
      _
    $region27: #{tpu_custom_call.1} parent=1 // pred_check_branch
      %1419 = sbr.rel (0) target = $region29
    $region28: #{tpu_custom_call.1} parent=1 // pred_region
      %1420 = dma.done [#allocation3], 64
    $region29: #{tpu_custom_call.1} parent=1 // pred_fallthru
      _
    // Predicated region
    $region30: #{tpu_custom_call.1} parent=1 // pred_check
      _
    $region31: #{tpu_custom_call.1} parent=1 // pred_check_branch
      %1422 = sbr.rel (0) target = $region33
    $region32: #{tpu_custom_call.1} parent=1 // pred_region
      %1423 = dma.done [#allocation7], 128
    $region33: #{tpu_custom_call.1} parent=1 // pred_fallthru
      _
    %1424 = vsyncpa [#allocation3], 1
    %1425 = vsyncpa [#allocation7], 1
    %1426 = vsyncpa [#allocation4], 1

</llo_original>
